<compile_context>
chip_gen: v6e
topology: v6e:2x2x1
jax: 0.10.0
libtpu: 0.0.40
codegen_flags: <defaults>
</compile_context>

<pallas_src>
import functools

import jax
import jax.numpy as jnp
import numpy as np
from jax import lax
from jax.experimental import pallas as pl
from jax.experimental.pallas import tpu as pltpu


# ---------------------------------------------------------------------------
# helpers (plain JAX, outside the kernel)
# ---------------------------------------------------------------------------
def adaptive_max_pool2d(x, out_hw):
    """F.adaptive_max_pool2d, NCHW."""
    B, C, H, W = x.shape
    oh, ow = out_hw
    if (H, W) == (oh, ow):
        return x
    # TODO(synk): only the output-divides-input case of adaptive max pooling.
    assert H % oh == 0 and W % ow == 0, "adaptive_max_pool2d: non-divisible case"
    kh, kw = H // oh, W // ow
    return lax.reduce_window(x, -jnp.inf, lax.max,
                             (1, 1, kh, kw), (1, 1, kh, kw), "VALID")


def _pick_row_tile(HW, target=512):
    """Largest multiple of 128 <= target that divides HW (else HW itself)."""
    if HW <= target:
        return HW
    for t in range(target, 0, -128):
        if HW % t == 0:
            return t
    return HW


# ---------------------------------------------------------------------------
# fused Pallas kernel: similarity map + gate + concat + 3x3 conv + GN + ReLU
# ---------------------------------------------------------------------------
def _fdm_expand_kernel(x_ref, fdm_ref, w_ref, p_ref, o_ref, sm_ref, slab_ref,
                       *, H, W, offs, row_tile, bblk,
                       gn_eps=1e-5, cos_eps=1e-8, sim_bf16=False):
    HW = H * W
    C = x_ref.shape[1]
    C2 = 2 * C
    Cout = o_ref.shape[1]
    n_row_blocks = HW // row_tile
    BIG = 4.0          # cos in [-1,1]; -4 guarantees non-selected rows lose the max

    # ---- per-destination-pixel tap validity masks, generated in-kernel ------
    pos = lax.broadcasted_iota(jnp.int32, (1, HW), 1)
    col = pos % W
    tap_masks = []
    for dy in offs:
        for dx in offs:
            valid = ((pos + dy * W >= 0) & (pos + dy * W < HW) &
                     (col + dx >= 0) & (col + dx < W))
            tap_masks.append(jnp.where(valid, 1.0, 0.0).astype(jnp.float32))
    neg_row = jnp.full((1, HW), -BIG, dtype=jnp.float32)

    # conv bias + GN affine packed into one (3*Cout, 1) constant
    pvec = p_ref[...]
    bias = pvec[0 * Cout:1 * Cout, :]
    gamma = pvec[1 * Cout:2 * Cout, :]
    beta = pvec[2 * Cout:3 * Cout, :]

    for s in range(bblk):
        x = x_ref[s].astype(jnp.float32)            # (C, HW), channels on sublanes
        fdm = fdm_ref[s]                            # (1, HW), lane-dense

        # ---- cosine-similarity saliency map (masked_select + cos + max) -----
        nsq = jnp.sum(x * x, axis=0, keepdims=True)                  # (1, HW)
        inv_n = 1.0 / jnp.maximum(jnp.sqrt(nsq), cos_eps)
        xn = x * inv_n                                               # (C, HW)
        thre = jnp.minimum(0.5, jnp.max(fdm) / 3.0)
        not_sel = jnp.where(fdm >= thre, 0.0, 1.0)                   # (1, HW)
        # Row masking folded into the matmul via one extra channel:
        #   sims[i, j] = cos(i, j) - BIG * not_sel[i]
        xl = jnp.concatenate([xn, not_sel], axis=0)                  # (C+1, HW)
        xr = jnp.concatenate([xn, neg_row], axis=0)                  # (C+1, HW)
        if sim_bf16:
            xl = xl.astype(jnp.bfloat16)
            xr = xr.astype(jnp.bfloat16)

        # running max lives directly in the sm output block (no extra scratch)
        sm_ref[s] = jnp.full((1, HW), -1.0, jnp.float32)
        for k in range(n_row_blocks):
            lo = k * row_tile
            blk_fdm_max = jnp.max(fdm[:, lo:lo + row_tile])

            @pl.when(blk_fdm_max >= thre)      # skip fully-unselected row blocks
            def _(lo=lo, s=s, xl=xl, xr=xr):
                xl_blk = xl[:, lo:lo + row_tile]                     # (C+1, T)
                sims = lax.dot_general(                              # (T, HW), f32 acc
                    xl_blk, xr, (((0,), (0,)), ((), ())),
                    preferred_element_type=jnp.float32)
                sm_ref[s] = jnp.maximum(sm_ref[s],
                                        jnp.max(sims, axis=0, keepdims=True))

        sm = sm_ref[s] * 0.5 + 0.5                                   # (1, HW)
        sm_ref[s] = sm

        # ---- gate + concat + im2col taps stored straight into VMEM scratch --
        xin = jnp.concatenate([x * sm, x], axis=0)                   # (2C, HW)
        c0 = s * HW
        t = 0
        for dy in offs:
            for dx in offs:
                off = dy * W + dx
                shifted = xin if off == 0 else jnp.roll(xin, -off, axis=1)
                slab_ref[t * C2:(t + 1) * C2, c0:c0 + HW] = shifted * tap_masks[t]
                t += 1

    # ---- 3x3 conv == ONE (Cout, K*K*2C) x (K*K*2C, bblk*HW) matmul ----------
    acc = jnp.dot(w_ref[...], slab_ref[...], preferred_element_type=jnp.float32)
    acc = acc + bias                                                 # (Cout, bblk*HW)

    # ---- GroupNorm(1, Cout) per sample (two-pass variance) + ReLU -----------
    cnt = float(Cout * HW)
    for s in range(bblk):
        a = acc[:, s * HW:(s + 1) * HW]
        mean = jnp.sum(a) / cnt
        d = a - mean
        var = jnp.sum(d * d) / cnt
        y = d * lax.rsqrt(var + gn_eps)
        y = y * gamma + beta
        o_ref[s] = jnp.maximum(y, 0.0).astype(o_ref.dtype)           # lane-dense store


# ---------------------------------------------------------------------------
# module forward (NCHW in / NCHW out, matching the PyTorch module)
# ---------------------------------------------------------------------------
def fdm_expand_block_new_forward(params, fdm, x, *, dilation=1, batch_block=1,
                                 row_tile_target=512, sim_bf16=False):
    """fdm: (B,1,Hf,Wf), x: (B,C,H,W)  ->  (x0: (B,C,H,W), sm: (B,1,H,W))."""
    B, C, H, W = x.shape
    HW = H * W
    w = params["fuse"]["w"]                       # (Cout, 2C, K, K), PyTorch OIHW
    Cout, Cin2, K, K2 = w.shape
    assert Cin2 == 2 * C and K == K2
    assert B % batch_block == 0, "batch_block must divide B"
    bblk = batch_block

    fdm_p = adaptive_max_pool2d(fdm, (H, W)).astype(jnp.float32)     # (B,1,H,W)

    # lane-dense kernel layouts (reshapes are free in XLA)
    x_flat = x.astype(jnp.float32).reshape(B, C, HW)                 # (B, C, HW)
    fdm_row = fdm_p.reshape(B, 1, HW)                                # (B, 1, HW)

    offs = tuple(dilation * (i - K // 2) for i in range(K))          # (-1, 0, 1)
    # conv weight packed as one (Cout, K*K*2C) matrix, tap-major / channel-minor
    w2 = jnp.transpose(w, (0, 2, 3, 1)).reshape(Cout, K * K * Cin2).astype(jnp.float32)
    # conv bias + GN gamma/beta merged into a single tiny constant input
    pvec = jnp.concatenate([params["fuse"]["b"].reshape(-1),
                            params["fuse"]["gamma"].reshape(-1),
                            params["fuse"]["beta"].reshape(-1)]).astype(jnp.float32)
    pvec = pvec.reshape(3 * Cout, 1)

    row_tile = _pick_row_tile(HW, row_tile_target)

    kern = functools.partial(_fdm_expand_kernel, H=H, W=W, offs=offs,
                             row_tile=row_tile, bblk=bblk, sim_bf16=sim_bf16)

    # VMEM budget: double-buffered I/O + im2col slab scratch + one sim tile.
    f32b = 4
    est = (2 * bblk * C * HW + 2 * bblk * 8 * HW          # x, fdm inputs
           + 2 * bblk * Cout * HW + 2 * bblk * 8 * HW     # x0, sm outputs
           + K * K * Cin2 * bblk * HW                     # slab scratch
           + row_tile * HW                                # similarity tile
           + 4 * (C + 1) * HW                             # xl / xr operands
           + 2 * Cout * max(K * K * Cin2, 128)) * f32b    # packed weights
    vmem_limit = int(min(64 << 20, max(32 << 20, est * 3 // 2)))     # v7x: 64 MiB/TC

    x0_flat, sm_flat = pl.pallas_call(
        kern,
        out_shape=(jax.ShapeDtypeStruct((B, Cout, HW), jnp.float32),
                   jax.ShapeDtypeStruct((B, 1, HW), jnp.float32)),
        grid=(B // bblk,),
        in_specs=[
            pl.BlockSpec((bblk, C, HW), lambda n: (n, 0, 0)),
            pl.BlockSpec((bblk, 1, HW), lambda n: (n, 0, 0)),
            pl.BlockSpec((Cout, K * K * Cin2), lambda n: (0, 0)),
            pl.BlockSpec((3 * Cout, 1), lambda n: (0, 0)),
        ],
        out_specs=(pl.BlockSpec((bblk, Cout, HW), lambda n: (n, 0, 0)),
                   pl.BlockSpec((bblk, 1, HW), lambda n: (n, 0, 0))),
        scratch_shapes=[pltpu.VMEM((K * K * Cin2, bblk * HW), jnp.float32)],
        compiler_params=pltpu.CompilerParams(
            dimension_semantics=("parallel",),            # batch axis -> both TCs on v7x
            vmem_limit_bytes=vmem_limit),
    )(x_flat, fdm_row, w2, pvec)

    return x0_flat.reshape(B, Cout, H, W), sm_flat.reshape(B, 1, H, W)


# ---------------------------------------------------------------------------
# plain-JAX reference of the PyTorch forward (for the in-script sanity check)
# ---------------------------------------------------------------------------
def _reference_forward(params, fdm, x):
    B, C, H, W = x.shape
    fdm_p = adaptive_max_pool2d(fdm, (H, W))
    sm_list = []
    for i in range(B):
        xt = jnp.transpose(x[i], (1, 2, 0)).reshape(H * W, C)        # (HW, C)
        ft = fdm_p[i, 0].reshape(H * W)
        thre = jnp.minimum(0.5, jnp.max(ft) / 3.0)
        nrm = jnp.maximum(jnp.sqrt(jnp.sum(xt * xt, axis=-1, keepdims=True)), 1e-8)
        xn = xt / nrm
        sims = xn @ xn.T
        sims = jnp.where((ft >= thre)[:, None], sims, -1e30)
        sm_list.append((jnp.max(sims, axis=0) * 0.5 + 0.5).reshape(1, H, W))
    sm = jnp.stack(sm_list, axis=0)                                  # (B,1,H,W)
    xin = jnp.concatenate([sm * x, x], axis=1)
    y = lax.conv_general_dilated(
        xin, params["fuse"]["w"], window_strides=(1, 1), padding=((1, 1), (1, 1)),
        dimension_numbers=("NCHW", "OIHW", "NCHW"))
    y = y + params["fuse"]["b"].reshape(1, -1, 1, 1)
    mean = jnp.mean(y, axis=(1, 2, 3), keepdims=True)
    var = jnp.mean((y - mean) ** 2, axis=(1, 2, 3), keepdims=True)
    y = (y - mean) / jnp.sqrt(var + 1e-5)
    y = y * params["fuse"]["gamma"].reshape(1, -1, 1, 1) \
          + params["fuse"]["beta"].reshape(1, -1, 1, 1)
    return jnp.maximum(y, 0.0), sm


# ---------------------------------------------------------------------------
if __name__ == "__main__":
    B, feat, H, W = 2, 8, 16, 16       # feat=8 -> channels fill the sublane tile
    Hf, Wf = 32, 32                    # fdm at 2x resolution -> exercises adaptive pool

    key = jax.random.PRNGKey(0)
    kw_, kb_, kg_, kbt_, kx_, kf_ = jax.random.split(key, 6)
    fan_in = 2 * feat * 9
    params = dict(fuse=dict(
        w=jax.random.normal(kw_, (feat, 2 * feat, 3, 3), jnp.float32) / float(fan_in) ** 0.5,
        b=0.01 * jax.random.normal(kb_, (feat,), jnp.float32),
        gamma=1.0 + 0.1 * jax.random.normal(kg_, (feat,), jnp.float32),
        beta=0.1 * jax.random.normal(kbt_, (feat,), jnp.float32)))

    x = jax.random.normal(kx_, (B, feat, H, W), jnp.float32)         # NCHW features
    fdm = jax.random.uniform(kf_, (B, 1, Hf, Wf), jnp.float32)       # NCHW fixation map

    x0_r, sm_r = _reference_forward(params, fdm, x)

    # batch_block=1: one sample per grid step (feeds v7x megacore).
    # batch_block=2: whole batch in one step, conv matmul N = 2*HW (v5e/v6e).
    for bblk in (1, 2):
        fwd = jax.jit(functools.partial(fdm_expand_block_new_forward, batch_block=bblk))
        x0, sm = fwd(params, fdm, x)
        jax.block_until_ready((x0, sm))
        assert x0.shape == (B, feat, H, W) and sm.shape == (B, 1, H, W)
        np.testing.assert_allclose(np.asarray(sm), np.asarray(sm_r), rtol=2e-3, atol=2e-3)
        np.testing.assert_allclose(np.asarray(x0), np.asarray(x0_r), rtol=2e-3, atol=2e-3)

    print("KERNEL_OK")
</pallas_src>

<mosaic_0001>
module attributes {stable_mosaic.version = 11 : i64} {
  func.func @_fdm_expand_kernel(%arg0: i32, %arg1: memref<1x8x256xf32, #tpu.memory_space<vmem>>, %arg2: memref<1x1x256xf32, #tpu.memory_space<vmem>>, %arg3: memref<8x144xf32, #tpu.memory_space<vmem>>, %arg4: memref<24x1xf32, #tpu.memory_space<vmem>>, %arg5: memref<1x8x256xf32, #tpu.memory_space<vmem>>, %arg6: memref<1x1x256xf32, #tpu.memory_space<vmem>>, %arg7: memref<144x256xf32, #tpu.memory_space<vmem>>) attributes {dimension_semantics = [#tpu.dimension_semantics<parallel>], iteration_bounds = array<i64: 2>, scalar_prefetch = 0 : i64, scratch_operands = 1 : i64, tpu.core_type = #tpu.core_type<tc>, window_params = [{transform_indices = @transform_0, window_bounds = array<i64: 1, 8, 256>}, {transform_indices = @transform_1, window_bounds = array<i64: 1, 1, 256>}, {pipeline_mode = #tpu.pipeline_mode<synchronous>, transform_indices = @transform_2, window_bounds = array<i64: 8, 144>}, {pipeline_mode = #tpu.pipeline_mode<synchronous>, transform_indices = @transform_3, window_bounds = array<i64: 24, 1>}, {transform_indices = @transform_4, window_bounds = array<i64: 1, 8, 256>}, {transform_indices = @transform_5, window_bounds = array<i64: 1, 1, 256>}]} {
    %0 = tpu.iota {dimensions = array<i32: 1>} : vector<1x256xi32>
    %c16_i32 = arith.constant 16 : i32
    %c0_i32 = arith.constant 0 : i32
    %1 = arith.cmpi eq, %c16_i32, %c0_i32 : i32
    %c1_i32 = arith.constant 1 : i32
    %2 = arith.select %1, %c1_i32, %c16_i32 : i32
    %3 = vector.broadcast %2 : i32 to vector<1x256xi32>
    %4 = arith.remsi %0, %3 : vector<1x256xi32>
    %c0_i32_0 = arith.constant 0 : i32
    %5 = vector.broadcast %c0_i32_0 : i32 to vector<1x256xi32>
    %6 = arith.cmpi ne, %4, %5 : vector<1x256xi32>
    %c0_i32_1 = arith.constant 0 : i32
    %7 = vector.broadcast %c0_i32_1 : i32 to vector<1x256xi32>
    %8 = arith.cmpi slt, %4, %7 : vector<1x256xi32>
    %c0_i32_2 = arith.constant 0 : i32
    %9 = arith.cmpi slt, %2, %c0_i32_2 : i32
    %10 = vector.broadcast %9 : i1 to vector<1x256xi1>
    %11 = vector.broadcast %10 : vector<1x256xi1> to vector<1x256xi1>
    %12 = arith.xori %8, %11 : vector<1x256xi1>
    %13 = arith.andi %12, %6 : vector<1x256xi1>
    %14 = vector.broadcast %2 : i32 to vector<1x256xi32>
    %15 = arith.addi %4, %14 : vector<1x256xi32>
    %16 = arith.select %13, %15, %4 : vector<1x256xi1>, vector<1x256xi32>
    %c-16_i32 = arith.constant -16 : i32
    %17 = vector.broadcast %c-16_i32 : i32 to vector<1x256xi32>
    %18 = arith.addi %0, %17 : vector<1x256xi32>
    %c0_i32_3 = arith.constant 0 : i32
    %19 = vector.broadcast %c0_i32_3 : i32 to vector<1x256xi32>
    %20 = arith.cmpi sge, %18, %19 : vector<1x256xi32>
    %c-16_i32_4 = arith.constant -16 : i32
    %21 = vector.broadcast %c-16_i32_4 : i32 to vector<1x256xi32>
    %22 = arith.addi %0, %21 : vector<1x256xi32>
    %c256_i32 = arith.constant 256 : i32
    %23 = vector.broadcast %c256_i32 : i32 to vector<1x256xi32>
    %24 = arith.cmpi slt, %22, %23 : vector<1x256xi32>
    %25 = arith.andi %20, %24 : vector<1x256xi1>
    %c-1_i32 = arith.constant -1 : i32
    %26 = vector.broadcast %c-1_i32 : i32 to vector<1x256xi32>
    %27 = arith.addi %16, %26 : vector<1x256xi32>
    %c0_i32_5 = arith.constant 0 : i32
    %28 = vector.broadcast %c0_i32_5 : i32 to vector<1x256xi32>
    %29 = arith.cmpi sge, %27, %28 : vector<1x256xi32>
    %30 = arith.andi %25, %29 : vector<1x256xi1>
    %c-1_i32_6 = arith.constant -1 : i32
    %31 = vector.broadcast %c-1_i32_6 : i32 to vector<1x256xi32>
    %32 = arith.addi %16, %31 : vector<1x256xi32>
    %c16_i32_7 = arith.constant 16 : i32
    %33 = vector.broadcast %c16_i32_7 : i32 to vector<1x256xi32>
    %34 = arith.cmpi slt, %32, %33 : vector<1x256xi32>
    %35 = arith.andi %30, %34 : vector<1x256xi1>
    %cst = arith.constant 1.000000e+00 : f32
    %cst_8 = arith.constant 0.000000e+00 : f32
    %36 = vector.broadcast %cst : f32 to vector<1x256xf32>
    %37 = vector.broadcast %cst_8 : f32 to vector<1x256xf32>
    %38 = arith.select %35, %36, %37 : vector<1x256xi1>, vector<1x256xf32>
    %c-16_i32_9 = arith.constant -16 : i32
    %39 = vector.broadcast %c-16_i32_9 : i32 to vector<1x256xi32>
    %40 = arith.addi %0, %39 : vector<1x256xi32>
    %c0_i32_10 = arith.constant 0 : i32
    %41 = vector.broadcast %c0_i32_10 : i32 to vector<1x256xi32>
    %42 = arith.cmpi sge, %40, %41 : vector<1x256xi32>
    %c-16_i32_11 = arith.constant -16 : i32
    %43 = vector.broadcast %c-16_i32_11 : i32 to vector<1x256xi32>
    %44 = arith.addi %0, %43 : vector<1x256xi32>
    %c256_i32_12 = arith.constant 256 : i32
    %45 = vector.broadcast %c256_i32_12 : i32 to vector<1x256xi32>
    %46 = arith.cmpi slt, %44, %45 : vector<1x256xi32>
    %47 = arith.andi %42, %46 : vector<1x256xi1>
    %c0_i32_13 = arith.constant 0 : i32
    %48 = vector.broadcast %c0_i32_13 : i32 to vector<1x256xi32>
    %49 = arith.addi %16, %48 : vector<1x256xi32>
    %c0_i32_14 = arith.constant 0 : i32
    %50 = vector.broadcast %c0_i32_14 : i32 to vector<1x256xi32>
    %51 = arith.cmpi sge, %49, %50 : vector<1x256xi32>
    %52 = arith.andi %47, %51 : vector<1x256xi1>
    %c0_i32_15 = arith.constant 0 : i32
    %53 = vector.broadcast %c0_i32_15 : i32 to vector<1x256xi32>
    %54 = arith.addi %16, %53 : vector<1x256xi32>
    %c16_i32_16 = arith.constant 16 : i32
    %55 = vector.broadcast %c16_i32_16 : i32 to vector<1x256xi32>
    %56 = arith.cmpi slt, %54, %55 : vector<1x256xi32>
    %57 = arith.andi %52, %56 : vector<1x256xi1>
    %cst_17 = arith.constant 1.000000e+00 : f32
    %cst_18 = arith.constant 0.000000e+00 : f32
    %58 = vector.broadcast %cst_17 : f32 to vector<1x256xf32>
    %59 = vector.broadcast %cst_18 : f32 to vector<1x256xf32>
    %60 = arith.select %57, %58, %59 : vector<1x256xi1>, vector<1x256xf32>
    %c-16_i32_19 = arith.constant -16 : i32
    %61 = vector.broadcast %c-16_i32_19 : i32 to vector<1x256xi32>
    %62 = arith.addi %0, %61 : vector<1x256xi32>
    %c0_i32_20 = arith.constant 0 : i32
    %63 = vector.broadcast %c0_i32_20 : i32 to vector<1x256xi32>
    %64 = arith.cmpi sge, %62, %63 : vector<1x256xi32>
    %c-16_i32_21 = arith.constant -16 : i32
    %65 = vector.broadcast %c-16_i32_21 : i32 to vector<1x256xi32>
    %66 = arith.addi %0, %65 : vector<1x256xi32>
    %c256_i32_22 = arith.constant 256 : i32
    %67 = vector.broadcast %c256_i32_22 : i32 to vector<1x256xi32>
    %68 = arith.cmpi slt, %66, %67 : vector<1x256xi32>
    %69 = arith.andi %64, %68 : vector<1x256xi1>
    %c1_i32_23 = arith.constant 1 : i32
    %70 = vector.broadcast %c1_i32_23 : i32 to vector<1x256xi32>
    %71 = arith.addi %16, %70 : vector<1x256xi32>
    %c0_i32_24 = arith.constant 0 : i32
    %72 = vector.broadcast %c0_i32_24 : i32 to vector<1x256xi32>
    %73 = arith.cmpi sge, %71, %72 : vector<1x256xi32>
    %74 = arith.andi %69, %73 : vector<1x256xi1>
    %c1_i32_25 = arith.constant 1 : i32
    %75 = vector.broadcast %c1_i32_25 : i32 to vector<1x256xi32>
    %76 = arith.addi %16, %75 : vector<1x256xi32>
    %c16_i32_26 = arith.constant 16 : i32
    %77 = vector.broadcast %c16_i32_26 : i32 to vector<1x256xi32>
    %78 = arith.cmpi slt, %76, %77 : vector<1x256xi32>
    %79 = arith.andi %74, %78 : vector<1x256xi1>
    %cst_27 = arith.constant 1.000000e+00 : f32
    %cst_28 = arith.constant 0.000000e+00 : f32
    %80 = vector.broadcast %cst_27 : f32 to vector<1x256xf32>
    %81 = vector.broadcast %cst_28 : f32 to vector<1x256xf32>
    %82 = arith.select %79, %80, %81 : vector<1x256xi1>, vector<1x256xf32>
    %c0_i32_29 = arith.constant 0 : i32
    %83 = vector.broadcast %c0_i32_29 : i32 to vector<1x256xi32>
    %84 = arith.addi %0, %83 : vector<1x256xi32>
    %c0_i32_30 = arith.constant 0 : i32
    %85 = vector.broadcast %c0_i32_30 : i32 to vector<1x256xi32>
    %86 = arith.cmpi sge, %84, %85 : vector<1x256xi32>
    %c0_i32_31 = arith.constant 0 : i32
    %87 = vector.broadcast %c0_i32_31 : i32 to vector<1x256xi32>
    %88 = arith.addi %0, %87 : vector<1x256xi32>
    %c256_i32_32 = arith.constant 256 : i32
    %89 = vector.broadcast %c256_i32_32 : i32 to vector<1x256xi32>
    %90 = arith.cmpi slt, %88, %89 : vector<1x256xi32>
    %91 = arith.andi %86, %90 : vector<1x256xi1>
    %c-1_i32_33 = arith.constant -1 : i32
    %92 = vector.broadcast %c-1_i32_33 : i32 to vector<1x256xi32>
    %93 = arith.addi %16, %92 : vector<1x256xi32>
    %c0_i32_34 = arith.constant 0 : i32
    %94 = vector.broadcast %c0_i32_34 : i32 to vector<1x256xi32>
    %95 = arith.cmpi sge, %93, %94 : vector<1x256xi32>
    %96 = arith.andi %91, %95 : vector<1x256xi1>
    %c-1_i32_35 = arith.constant -1 : i32
    %97 = vector.broadcast %c-1_i32_35 : i32 to vector<1x256xi32>
    %98 = arith.addi %16, %97 : vector<1x256xi32>
    %c16_i32_36 = arith.constant 16 : i32
    %99 = vector.broadcast %c16_i32_36 : i32 to vector<1x256xi32>
    %100 = arith.cmpi slt, %98, %99 : vector<1x256xi32>
    %101 = arith.andi %96, %100 : vector<1x256xi1>
    %cst_37 = arith.constant 1.000000e+00 : f32
    %cst_38 = arith.constant 0.000000e+00 : f32
    %102 = vector.broadcast %cst_37 : f32 to vector<1x256xf32>
    %103 = vector.broadcast %cst_38 : f32 to vector<1x256xf32>
    %104 = arith.select %101, %102, %103 : vector<1x256xi1>, vector<1x256xf32>
    %c0_i32_39 = arith.constant 0 : i32
    %105 = vector.broadcast %c0_i32_39 : i32 to vector<1x256xi32>
    %106 = arith.addi %0, %105 : vector<1x256xi32>
    %c0_i32_40 = arith.constant 0 : i32
    %107 = vector.broadcast %c0_i32_40 : i32 to vector<1x256xi32>
    %108 = arith.cmpi sge, %106, %107 : vector<1x256xi32>
    %c0_i32_41 = arith.constant 0 : i32
    %109 = vector.broadcast %c0_i32_41 : i32 to vector<1x256xi32>
    %110 = arith.addi %0, %109 : vector<1x256xi32>
    %c256_i32_42 = arith.constant 256 : i32
    %111 = vector.broadcast %c256_i32_42 : i32 to vector<1x256xi32>
    %112 = arith.cmpi slt, %110, %111 : vector<1x256xi32>
    %113 = arith.andi %108, %112 : vector<1x256xi1>
    %c0_i32_43 = arith.constant 0 : i32
    %114 = vector.broadcast %c0_i32_43 : i32 to vector<1x256xi32>
    %115 = arith.addi %16, %114 : vector<1x256xi32>
    %c0_i32_44 = arith.constant 0 : i32
    %116 = vector.broadcast %c0_i32_44 : i32 to vector<1x256xi32>
    %117 = arith.cmpi sge, %115, %116 : vector<1x256xi32>
    %118 = arith.andi %113, %117 : vector<1x256xi1>
    %c0_i32_45 = arith.constant 0 : i32
    %119 = vector.broadcast %c0_i32_45 : i32 to vector<1x256xi32>
    %120 = arith.addi %16, %119 : vector<1x256xi32>
    %c16_i32_46 = arith.constant 16 : i32
    %121 = vector.broadcast %c16_i32_46 : i32 to vector<1x256xi32>
    %122 = arith.cmpi slt, %120, %121 : vector<1x256xi32>
    %123 = arith.andi %118, %122 : vector<1x256xi1>
    %cst_47 = arith.constant 1.000000e+00 : f32
    %cst_48 = arith.constant 0.000000e+00 : f32
    %124 = vector.broadcast %cst_47 : f32 to vector<1x256xf32>
    %125 = vector.broadcast %cst_48 : f32 to vector<1x256xf32>
    %126 = arith.select %123, %124, %125 : vector<1x256xi1>, vector<1x256xf32>
    %c0_i32_49 = arith.constant 0 : i32
    %127 = vector.broadcast %c0_i32_49 : i32 to vector<1x256xi32>
    %128 = arith.addi %0, %127 : vector<1x256xi32>
    %c0_i32_50 = arith.constant 0 : i32
    %129 = vector.broadcast %c0_i32_50 : i32 to vector<1x256xi32>
    %130 = arith.cmpi sge, %128, %129 : vector<1x256xi32>
    %c0_i32_51 = arith.constant 0 : i32
    %131 = vector.broadcast %c0_i32_51 : i32 to vector<1x256xi32>
    %132 = arith.addi %0, %131 : vector<1x256xi32>
    %c256_i32_52 = arith.constant 256 : i32
    %133 = vector.broadcast %c256_i32_52 : i32 to vector<1x256xi32>
    %134 = arith.cmpi slt, %132, %133 : vector<1x256xi32>
    %135 = arith.andi %130, %134 : vector<1x256xi1>
    %c1_i32_53 = arith.constant 1 : i32
    %136 = vector.broadcast %c1_i32_53 : i32 to vector<1x256xi32>
    %137 = arith.addi %16, %136 : vector<1x256xi32>
    %c0_i32_54 = arith.constant 0 : i32
    %138 = vector.broadcast %c0_i32_54 : i32 to vector<1x256xi32>
    %139 = arith.cmpi sge, %137, %138 : vector<1x256xi32>
    %140 = arith.andi %135, %139 : vector<1x256xi1>
    %c1_i32_55 = arith.constant 1 : i32
    %141 = vector.broadcast %c1_i32_55 : i32 to vector<1x256xi32>
    %142 = arith.addi %16, %141 : vector<1x256xi32>
    %c16_i32_56 = arith.constant 16 : i32
    %143 = vector.broadcast %c16_i32_56 : i32 to vector<1x256xi32>
    %144 = arith.cmpi slt, %142, %143 : vector<1x256xi32>
    %145 = arith.andi %140, %144 : vector<1x256xi1>
    %cst_57 = arith.constant 1.000000e+00 : f32
    %cst_58 = arith.constant 0.000000e+00 : f32
    %146 = vector.broadcast %cst_57 : f32 to vector<1x256xf32>
    %147 = vector.broadcast %cst_58 : f32 to vector<1x256xf32>
    %148 = arith.select %145, %146, %147 : vector<1x256xi1>, vector<1x256xf32>
    %c16_i32_59 = arith.constant 16 : i32
    %149 = vector.broadcast %c16_i32_59 : i32 to vector<1x256xi32>
    %150 = arith.addi %0, %149 : vector<1x256xi32>
    %c0_i32_60 = arith.constant 0 : i32
    %151 = vector.broadcast %c0_i32_60 : i32 to vector<1x256xi32>
    %152 = arith.cmpi sge, %150, %151 : vector<1x256xi32>
    %c16_i32_61 = arith.constant 16 : i32
    %153 = vector.broadcast %c16_i32_61 : i32 to vector<1x256xi32>
    %154 = arith.addi %0, %153 : vector<1x256xi32>
    %c256_i32_62 = arith.constant 256 : i32
    %155 = vector.broadcast %c256_i32_62 : i32 to vector<1x256xi32>
    %156 = arith.cmpi slt, %154, %155 : vector<1x256xi32>
    %157 = arith.andi %152, %156 : vector<1x256xi1>
    %c-1_i32_63 = arith.constant -1 : i32
    %158 = vector.broadcast %c-1_i32_63 : i32 to vector<1x256xi32>
    %159 = arith.addi %16, %158 : vector<1x256xi32>
    %c0_i32_64 = arith.constant 0 : i32
    %160 = vector.broadcast %c0_i32_64 : i32 to vector<1x256xi32>
    %161 = arith.cmpi sge, %159, %160 : vector<1x256xi32>
    %162 = arith.andi %157, %161 : vector<1x256xi1>
    %c-1_i32_65 = arith.constant -1 : i32
    %163 = vector.broadcast %c-1_i32_65 : i32 to vector<1x256xi32>
    %164 = arith.addi %16, %163 : vector<1x256xi32>
    %c16_i32_66 = arith.constant 16 : i32
    %165 = vector.broadcast %c16_i32_66 : i32 to vector<1x256xi32>
    %166 = arith.cmpi slt, %164, %165 : vector<1x256xi32>
    %167 = arith.andi %162, %166 : vector<1x256xi1>
    %cst_67 = arith.constant 1.000000e+00 : f32
    %cst_68 = arith.constant 0.000000e+00 : f32
    %168 = vector.broadcast %cst_67 : f32 to vector<1x256xf32>
    %169 = vector.broadcast %cst_68 : f32 to vector<1x256xf32>
    %170 = arith.select %167, %168, %169 : vector<1x256xi1>, vector<1x256xf32>
    %c16_i32_69 = arith.constant 16 : i32
    %171 = vector.broadcast %c16_i32_69 : i32 to vector<1x256xi32>
    %172 = arith.addi %0, %171 : vector<1x256xi32>
    %c0_i32_70 = arith.constant 0 : i32
    %173 = vector.broadcast %c0_i32_70 : i32 to vector<1x256xi32>
    %174 = arith.cmpi sge, %172, %173 : vector<1x256xi32>
    %c16_i32_71 = arith.constant 16 : i32
    %175 = vector.broadcast %c16_i32_71 : i32 to vector<1x256xi32>
    %176 = arith.addi %0, %175 : vector<1x256xi32>
    %c256_i32_72 = arith.constant 256 : i32
    %177 = vector.broadcast %c256_i32_72 : i32 to vector<1x256xi32>
    %178 = arith.cmpi slt, %176, %177 : vector<1x256xi32>
    %179 = arith.andi %174, %178 : vector<1x256xi1>
    %c0_i32_73 = arith.constant 0 : i32
    %180 = vector.broadcast %c0_i32_73 : i32 to vector<1x256xi32>
    %181 = arith.addi %16, %180 : vector<1x256xi32>
    %c0_i32_74 = arith.constant 0 : i32
    %182 = vector.broadcast %c0_i32_74 : i32 to vector<1x256xi32>
    %183 = arith.cmpi sge, %181, %182 : vector<1x256xi32>
    %184 = arith.andi %179, %183 : vector<1x256xi1>
    %c0_i32_75 = arith.constant 0 : i32
    %185 = vector.broadcast %c0_i32_75 : i32 to vector<1x256xi32>
    %186 = arith.addi %16, %185 : vector<1x256xi32>
    %c16_i32_76 = arith.constant 16 : i32
    %187 = vector.broadcast %c16_i32_76 : i32 to vector<1x256xi32>
    %188 = arith.cmpi slt, %186, %187 : vector<1x256xi32>
    %189 = arith.andi %184, %188 : vector<1x256xi1>
    %cst_77 = arith.constant 1.000000e+00 : f32
    %cst_78 = arith.constant 0.000000e+00 : f32
    %190 = vector.broadcast %cst_77 : f32 to vector<1x256xf32>
    %191 = vector.broadcast %cst_78 : f32 to vector<1x256xf32>
    %192 = arith.select %189, %190, %191 : vector<1x256xi1>, vector<1x256xf32>
    %c16_i32_79 = arith.constant 16 : i32
    %193 = vector.broadcast %c16_i32_79 : i32 to vector<1x256xi32>
    %194 = arith.addi %0, %193 : vector<1x256xi32>
    %c0_i32_80 = arith.constant 0 : i32
    %195 = vector.broadcast %c0_i32_80 : i32 to vector<1x256xi32>
    %196 = arith.cmpi sge, %194, %195 : vector<1x256xi32>
    %c16_i32_81 = arith.constant 16 : i32
    %197 = vector.broadcast %c16_i32_81 : i32 to vector<1x256xi32>
    %198 = arith.addi %0, %197 : vector<1x256xi32>
    %c256_i32_82 = arith.constant 256 : i32
    %199 = vector.broadcast %c256_i32_82 : i32 to vector<1x256xi32>
    %200 = arith.cmpi slt, %198, %199 : vector<1x256xi32>
    %201 = arith.andi %196, %200 : vector<1x256xi1>
    %c1_i32_83 = arith.constant 1 : i32
    %202 = vector.broadcast %c1_i32_83 : i32 to vector<1x256xi32>
    %203 = arith.addi %16, %202 : vector<1x256xi32>
    %c0_i32_84 = arith.constant 0 : i32
    %204 = vector.broadcast %c0_i32_84 : i32 to vector<1x256xi32>
    %205 = arith.cmpi sge, %203, %204 : vector<1x256xi32>
    %206 = arith.andi %201, %205 : vector<1x256xi1>
    %c1_i32_85 = arith.constant 1 : i32
    %207 = vector.broadcast %c1_i32_85 : i32 to vector<1x256xi32>
    %208 = arith.addi %16, %207 : vector<1x256xi32>
    %c16_i32_86 = arith.constant 16 : i32
    %209 = vector.broadcast %c16_i32_86 : i32 to vector<1x256xi32>
    %210 = arith.cmpi slt, %208, %209 : vector<1x256xi32>
    %211 = arith.andi %206, %210 : vector<1x256xi1>
    %cst_87 = arith.constant 1.000000e+00 : f32
    %cst_88 = arith.constant 0.000000e+00 : f32
    %212 = vector.broadcast %cst_87 : f32 to vector<1x256xf32>
    %213 = vector.broadcast %cst_88 : f32 to vector<1x256xf32>
    %214 = arith.select %211, %212, %213 : vector<1x256xi1>, vector<1x256xf32>
    %cst_89 = arith.constant -4.000000e+00 : f32
    %215 = vector.broadcast %cst_89 : f32 to vector<1x256xf32>
    %c0 = arith.constant 0 : index
    %c0_90 = arith.constant 0 : index
    %216 = vector.load %arg4[%c0, %c0_90] : memref<24x1xf32, #tpu.memory_space<vmem>>, vector<24x1xf32>
    %217 = vector.extract_strided_slice %216 {offsets = [0, 0], sizes = [8, 1], strides = [1, 1]} : vector<24x1xf32> to vector<8x1xf32>
    %218 = vector.extract_strided_slice %216 {offsets = [8, 0], sizes = [8, 1], strides = [1, 1]} : vector<24x1xf32> to vector<8x1xf32>
    %219 = vector.extract_strided_slice %216 {offsets = [16, 0], sizes = [8, 1], strides = [1, 1]} : vector<24x1xf32> to vector<8x1xf32>
    %c0_91 = arith.constant 0 : index
    %c0_92 = arith.constant 0 : index
    %c0_93 = arith.constant 0 : index
    %220 = vector.load %arg1[%c0_91, %c0_92, %c0_93] : memref<1x8x256xf32, #tpu.memory_space<vmem>>, vector<1x8x256xf32>
    %221 = vector.shape_cast %220 : vector<1x8x256xf32> to vector<8x256xf32>
    %c0_94 = arith.constant 0 : index
    %c0_95 = arith.constant 0 : index
    %c0_96 = arith.constant 0 : index
    %222 = vector.load %arg2[%c0_94, %c0_95, %c0_96] : memref<1x1x256xf32, #tpu.memory_space<vmem>>, vector<1x1x256xf32>
    %223 = vector.shape_cast %222 : vector<1x1x256xf32> to vector<1x256xf32>
    %224 = arith.mulf %221, %221 : vector<8x256xf32>
    %cst_97 = arith.constant dense<0.000000e+00> : vector<256xf32>
    %225 = vector.multi_reduction <add>, %224, %cst_97 [0] : vector<8x256xf32> to vector<256xf32>
    %226 = vector.shape_cast %225 : vector<256xf32> to vector<1x256xf32>
    %227 = math.sqrt %226 : vector<1x256xf32>
    %cst_98 = arith.constant 9.99999993E-9 : f32
    %228 = vector.broadcast %cst_98 : f32 to vector<1x256xf32>
    %229 = arith.maximumf %227, %228 : vector<1x256xf32>
    %cst_99 = arith.constant 1.000000e+00 : f32
    %230 = vector.broadcast %cst_99 : f32 to vector<1x256xf32>
    %231 = arith.divf %230, %229 : vector<1x256xf32>
    %232 = vector.broadcast %231 : vector<1x256xf32> to vector<8x256xf32>
    %233 = arith.mulf %221, %232 : vector<8x256xf32>
    %234 = vector.shape_cast %223 : vector<1x256xf32> to vector<1x1x256xf32>
    %cst_100 = arith.constant dense<0xFF800000> : vector<1xf32>
    %235 = vector.multi_reduction <maximumf>, %234, %cst_100 [1, 2] : vector<1x1x256xf32> to vector<1xf32>
    %236 = vector.shape_cast %235 : vector<1xf32> to vector<1x1x1xf32>
    %237 = vector.extract %236[0, 0, 0] : f32 from vector<1x1x1xf32>
    %cst_101 = arith.constant 3.000000e+00 : f32
    %238 = arith.divf %237, %cst_101 : f32
    %cst_102 = arith.constant 5.000000e-01 : f32
    %239 = arith.minimumf %cst_102, %238 : f32
    %240 = vector.broadcast %239 : f32 to vector<1x256xf32>
    %241 = arith.cmpf oge, %223, %240 : vector<1x256xf32>
    %cst_103 = arith.constant 0.000000e+00 : f32
    %cst_104 = arith.constant 1.000000e+00 : f32
    %242 = vector.broadcast %cst_103 : f32 to vector<1x256xf32>
    %243 = vector.broadcast %cst_104 : f32 to vector<1x256xf32>
    %244 = arith.select %241, %242, %243 : vector<1x256xi1>, vector<1x256xf32>
    %245 = tpu.concatenate %233, %244 in 0 : vector<8x256xf32>, vector<1x256xf32> -> vector<9x256xf32>
    %246 = tpu.concatenate %233, %215 in 0 : vector<8x256xf32>, vector<1x256xf32> -> vector<9x256xf32>
    %cst_105 = arith.constant -1.000000e+00 : f32
    %247 = vector.broadcast %cst_105 : f32 to vector<1x256xf32>
    %c0_106 = arith.constant 0 : index
    %c0_107 = arith.constant 0 : index
    %c0_108 = arith.constant 0 : index
    %248 = vector.load %arg6[%c0_106, %c0_107, %c0_108] : memref<1x1x256xf32, #tpu.memory_space<vmem>>, vector<1x1x256xf32>
    %249 = vector.shape_cast %248 : vector<1x1x256xf32> to vector<1x256xf32>
    %250 = vector.shape_cast %247 : vector<1x256xf32> to vector<1x1x256xf32>
    tpu.vector_store %arg6[%c0_106, %c0_107, %c0_108], %250 {strides = array<i32>} : memref<1x1x256xf32, #tpu.memory_space<vmem>>, vector<1x1x256xf32>,
    %251 = vector.shape_cast %223 : vector<1x256xf32> to vector<1x1x256xf32>
    %cst_109 = arith.constant dense<0xFF800000> : vector<1xf32>
    %252 = vector.multi_reduction <maximumf>, %251, %cst_109 [1, 2] : vector<1x1x256xf32> to vector<1xf32>
    %253 = vector.shape_cast %252 : vector<1xf32> to vector<1x1x1xf32>
    %254 = vector.extract %253[0, 0, 0] : f32 from vector<1x1x1xf32>
    %255 = arith.cmpf oge, %254, %239 : f32
    %256 = arith.extui %255 : i1 to i32
    %c0_i32_110 = arith.constant 0 : i32
    %257 = arith.cmpi ne, %256, %c0_i32_110 : i32
    scf.if %257 {
      %cst_143 = arith.constant dense<0.000000e+00> : vector<256x256xf32>
      %352 = tpu.matmul %245, %246, %cst_143 {dimension_numbers = #tpu.dot_dimension_numbers<[0], [0], [1], [1], [0, 1, 1, 1], [], []>} : vector<9x256xf32>, vector<9x256xf32>, vector<256x256xf32> -> vector<256x256xf32>
      %c0_144 = arith.constant 0 : index
      %c0_145 = arith.constant 0 : index
      %c0_146 = arith.constant 0 : index
      %353 = vector.load %arg6[%c0_144, %c0_145, %c0_146] : memref<1x1x256xf32, #tpu.memory_space<vmem>>, vector<1x1x256xf32>
      %354 = vector.shape_cast %353 : vector<1x1x256xf32> to vector<1x256xf32>
      %cst_147 = arith.constant dense<0xFF800000> : vector<256xf32>
      %355 = vector.multi_reduction <maximumf>, %352, %cst_147 [0] : vector<256x256xf32> to vector<256xf32>
      %356 = vector.shape_cast %355 : vector<256xf32> to vector<1x256xf32>
      %357 = arith.maximumf %354, %356 : vector<1x256xf32>
      %c0_148 = arith.constant 0 : index
      %c0_149 = arith.constant 0 : index
      %c0_150 = arith.constant 0 : index
      %358 = vector.load %arg6[%c0_148, %c0_149, %c0_150] : memref<1x1x256xf32, #tpu.memory_space<vmem>>, vector<1x1x256xf32>
      %359 = vector.shape_cast %358 : vector<1x1x256xf32> to vector<1x256xf32>
      %360 = vector.shape_cast %357 : vector<1x256xf32> to vector<1x1x256xf32>
      tpu.vector_store %arg6[%c0_148, %c0_149, %c0_150], %360 {strides = array<i32>} : memref<1x1x256xf32, #tpu.memory_space<vmem>>, vector<1x1x256xf32>,
    } else {
    }
    %c0_111 = arith.constant 0 : index
    %c0_112 = arith.constant 0 : index
    %c0_113 = arith.constant 0 : index
    %258 = vector.load %arg6[%c0_111, %c0_112, %c0_113] : memref<1x1x256xf32, #tpu.memory_space<vmem>>, vector<1x1x256xf32>
    %259 = vector.shape_cast %258 : vector<1x1x256xf32> to vector<1x256xf32>
    %cst_114 = arith.constant 5.000000e-01 : f32
    %260 = vector.broadcast %cst_114 : f32 to vector<1x256xf32>
    %261 = arith.mulf %259, %260 : vector<1x256xf32>
    %cst_115 = arith.constant 5.000000e-01 : f32
    %262 = vector.broadcast %cst_115 : f32 to vector<1x256xf32>
    %263 = arith.addf %261, %262 : vector<1x256xf32>
    %c0_116 = arith.constant 0 : index
    %c0_117 = arith.constant 0 : index
    %c0_118 = arith.constant 0 : index
    %264 = vector.load %arg6[%c0_116, %c0_117, %c0_118] : memref<1x1x256xf32, #tpu.memory_space<vmem>>, vector<1x1x256xf32>
    %265 = vector.shape_cast %264 : vector<1x1x256xf32> to vector<1x256xf32>
    %266 = vector.shape_cast %263 : vector<1x256xf32> to vector<1x1x256xf32>
    tpu.vector_store %arg6[%c0_116, %c0_117, %c0_118], %266 {strides = array<i32>} : memref<1x1x256xf32, #tpu.memory_space<vmem>>, vector<1x1x256xf32>,
    %267 = vector.broadcast %263 : vector<1x256xf32> to vector<8x256xf32>
    %268 = arith.mulf %221, %267 : vector<8x256xf32>
    %269 = tpu.concatenate %268, %221 in 0 : vector<8x256xf32>, vector<8x256xf32> -> vector<16x256xf32>
    %270 = vector.extract_strided_slice %269 {offsets = [0, 239], sizes = [16, 17], strides = [1, 1]} : vector<16x256xf32> to vector<16x17xf32>
    %271 = vector.extract_strided_slice %269 {offsets = [0, 0], sizes = [16, 239], strides = [1, 1]} : vector<16x256xf32> to vector<16x239xf32>
    %272 = tpu.concatenate %270, %271 in 1 : vector<16x17xf32>, vector<16x239xf32> -> vector<16x256xf32>
    %273 = vector.broadcast %38 : vector<1x256xf32> to vector<16x256xf32>
    %274 = arith.mulf %272, %273 : vector<16x256xf32>
    %c0_119 = arith.constant 0 : index
    %c0_120 = arith.constant 0 : index
    %275 = vector.load %arg7[%c0_119, %c0_120] : memref<144x256xf32, #tpu.memory_space<vmem>>, vector<16x256xf32>
    tpu.vector_store %arg7[%c0_119, %c0_120], %274 {strides = array<i32>} : memref<144x256xf32, #tpu.memory_space<vmem>>, vector<16x256xf32>,
    %276 = vector.extract_strided_slice %269 {offsets = [0, 240], sizes = [16, 16], strides = [1, 1]} : vector<16x256xf32> to vector<16x16xf32>
    %277 = vector.extract_strided_slice %269 {offsets = [0, 0], sizes = [16, 240], strides = [1, 1]} : vector<16x256xf32> to vector<16x240xf32>
    %278 = tpu.concatenate %276, %277 in 1 : vector<16x16xf32>, vector<16x240xf32> -> vector<16x256xf32>
    %279 = vector.broadcast %60 : vector<1x256xf32> to vector<16x256xf32>
    %280 = arith.mulf %278, %279 : vector<16x256xf32>
    %c16 = arith.constant 16 : index
    %c0_121 = arith.constant 0 : index
    %281 = vector.load %arg7[%c16, %c0_121] : memref<144x256xf32, #tpu.memory_space<vmem>>, vector<16x256xf32>
    tpu.vector_store %arg7[%c16, %c0_121], %280 {strides = array<i32>} : memref<144x256xf32, #tpu.memory_space<vmem>>, vector<16x256xf32>,
    %282 = vector.extract_strided_slice %269 {offsets = [0, 241], sizes = [16, 15], strides = [1, 1]} : vector<16x256xf32> to vector<16x15xf32>
    %283 = vector.extract_strided_slice %269 {offsets = [0, 0], sizes = [16, 241], strides = [1, 1]} : vector<16x256xf32> to vector<16x241xf32>
    %284 = tpu.concatenate %282, %283 in 1 : vector<16x15xf32>, vector<16x241xf32> -> vector<16x256xf32>
    %285 = vector.broadcast %82 : vector<1x256xf32> to vector<16x256xf32>
    %286 = arith.mulf %284, %285 : vector<16x256xf32>
    %c32 = arith.constant 32 : index
    %c0_122 = arith.constant 0 : index
    %287 = vector.load %arg7[%c32, %c0_122] : memref<144x256xf32, #tpu.memory_space<vmem>>, vector<16x256xf32>
    tpu.vector_store %arg7[%c32, %c0_122], %286 {strides = array<i32>} : memref<144x256xf32, #tpu.memory_space<vmem>>, vector<16x256xf32>,
    %288 = vector.extract_strided_slice %269 {offsets = [0, 255], sizes = [16, 1], strides = [1, 1]} : vector<16x256xf32> to vector<16x1xf32>
    %289 = vector.extract_strided_slice %269 {offsets = [0, 0], sizes = [16, 255], strides = [1, 1]} : vector<16x256xf32> to vector<16x255xf32>
    %290 = tpu.concatenate %288, %289 in 1 : vector<16x1xf32>, vector<16x255xf32> -> vector<16x256xf32>
    %291 = vector.broadcast %104 : vector<1x256xf32> to vector<16x256xf32>
    %292 = arith.mulf %290, %291 : vector<16x256xf32>
    %c48 = arith.constant 48 : index
    %c0_123 = arith.constant 0 : index
    %293 = vector.load %arg7[%c48, %c0_123] : memref<144x256xf32, #tpu.memory_space<vmem>>, vector<16x256xf32>
    tpu.vector_store %arg7[%c48, %c0_123], %292 {strides = array<i32>} : memref<144x256xf32, #tpu.memory_space<vmem>>, vector<16x256xf32>,
    %294 = vector.broadcast %126 : vector<1x256xf32> to vector<16x256xf32>
    %295 = arith.mulf %269, %294 : vector<16x256xf32>
    %c64 = arith.constant 64 : index
    %c0_124 = arith.constant 0 : index
    %296 = vector.load %arg7[%c64, %c0_124] : memref<144x256xf32, #tpu.memory_space<vmem>>, vector<16x256xf32>
    tpu.vector_store %arg7[%c64, %c0_124], %295 {strides = array<i32>} : memref<144x256xf32, #tpu.memory_space<vmem>>, vector<16x256xf32>,
    %297 = vector.extract_strided_slice %269 {offsets = [0, 1], sizes = [16, 255], strides = [1, 1]} : vector<16x256xf32> to vector<16x255xf32>
    %298 = vector.extract_strided_slice %269 {offsets = [0, 0], sizes = [16, 1], strides = [1, 1]} : vector<16x256xf32> to vector<16x1xf32>
    %299 = tpu.concatenate %297, %298 in 1 : vector<16x255xf32>, vector<16x1xf32> -> vector<16x256xf32>
    %300 = vector.broadcast %148 : vector<1x256xf32> to vector<16x256xf32>
    %301 = arith.mulf %299, %300 : vector<16x256xf32>
    %c80 = arith.constant 80 : index
    %c0_125 = arith.constant 0 : index
    %302 = vector.load %arg7[%c80, %c0_125] : memref<144x256xf32, #tpu.memory_space<vmem>>, vector<16x256xf32>
    tpu.vector_store %arg7[%c80, %c0_125], %301 {strides = array<i32>} : memref<144x256xf32, #tpu.memory_space<vmem>>, vector<16x256xf32>,
    %303 = vector.extract_strided_slice %269 {offsets = [0, 15], sizes = [16, 241], strides = [1, 1]} : vector<16x256xf32> to vector<16x241xf32>
    %304 = vector.extract_strided_slice %269 {offsets = [0, 0], sizes = [16, 15], strides = [1, 1]} : vector<16x256xf32> to vector<16x15xf32>
    %305 = tpu.concatenate %303, %304 in 1 : vector<16x241xf32>, vector<16x15xf32> -> vector<16x256xf32>
    %306 = vector.broadcast %170 : vector<1x256xf32> to vector<16x256xf32>
    %307 = arith.mulf %305, %306 : vector<16x256xf32>
    %c96 = arith.constant 96 : index
    %c0_126 = arith.constant 0 : index
    %308 = vector.load %arg7[%c96, %c0_126] : memref<144x256xf32, #tpu.memory_space<vmem>>, vector<16x256xf32>
    tpu.vector_store %arg7[%c96, %c0_126], %307 {strides = array<i32>} : memref<144x256xf32, #tpu.memory_space<vmem>>, vector<16x256xf32>,
    %309 = vector.extract_strided_slice %269 {offsets = [0, 16], sizes = [16, 240], strides = [1, 1]} : vector<16x256xf32> to vector<16x240xf32>
    %310 = vector.extract_strided_slice %269 {offsets = [0, 0], sizes = [16, 16], strides = [1, 1]} : vector<16x256xf32> to vector<16x16xf32>
    %311 = tpu.concatenate %309, %310 in 1 : vector<16x240xf32>, vector<16x16xf32> -> vector<16x256xf32>
    %312 = vector.broadcast %192 : vector<1x256xf32> to vector<16x256xf32>
    %313 = arith.mulf %311, %312 : vector<16x256xf32>
    %c112 = arith.constant 112 : index
    %c0_127 = arith.constant 0 : index
    %314 = vector.load %arg7[%c112, %c0_127] : memref<144x256xf32, #tpu.memory_space<vmem>>, vector<16x256xf32>
    tpu.vector_store %arg7[%c112, %c0_127], %313 {strides = array<i32>} : memref<144x256xf32, #tpu.memory_space<vmem>>, vector<16x256xf32>,
    %315 = vector.extract_strided_slice %269 {offsets = [0, 17], sizes = [16, 239], strides = [1, 1]} : vector<16x256xf32> to vector<16x239xf32>
    %316 = vector.extract_strided_slice %269 {offsets = [0, 0], sizes = [16, 17], strides = [1, 1]} : vector<16x256xf32> to vector<16x17xf32>
    %317 = tpu.concatenate %315, %316 in 1 : vector<16x239xf32>, vector<16x17xf32> -> vector<16x256xf32>
    %318 = vector.broadcast %214 : vector<1x256xf32> to vector<16x256xf32>
    %319 = arith.mulf %317, %318 : vector<16x256xf32>
    %c128 = arith.constant 128 : index
    %c0_128 = arith.constant 0 : index
    %320 = vector.load %arg7[%c128, %c0_128] : memref<144x256xf32, #tpu.memory_space<vmem>>, vector<16x256xf32>
    tpu.vector_store %arg7[%c128, %c0_128], %319 {strides = array<i32>} : memref<144x256xf32, #tpu.memory_space<vmem>>, vector<16x256xf32>,
    %c0_129 = arith.constant 0 : index
    %c0_130 = arith.constant 0 : index
    %321 = vector.load %arg3[%c0_129, %c0_130] : memref<8x144xf32, #tpu.memory_space<vmem>>, vector<8x144xf32>
    %c0_131 = arith.constant 0 : index
    %c0_132 = arith.constant 0 : index
    %322 = vector.load %arg7[%c0_131, %c0_132] : memref<144x256xf32, #tpu.memory_space<vmem>>, vector<144x256xf32>
    %cst_133 = arith.constant dense<0.000000e+00> : vector<8x256xf32>
    %323 = tpu.matmul %321, %322, %cst_133 {dimension_numbers = #tpu.dot_dimension_numbers<[1], [0], [0], [1], [0, 0, 1, 1], [], []>} : vector<8x144xf32>, vector<144x256xf32>, vector<8x256xf32> -> vector<8x256xf32>
    %324 = vector.broadcast %217 : vector<8x1xf32> to vector<8x256xf32>
    %325 = arith.addf %323, %324 : vector<8x256xf32>
    %326 = vector.shape_cast %325 : vector<8x256xf32> to vector<1x8x256xf32>
    %cst_134 = arith.constant dense<0.000000e+00> : vector<1xf32>
    %327 = vector.multi_reduction <add>, %326, %cst_134 [1, 2] : vector<1x8x256xf32> to vector<1xf32>
    %328 = vector.shape_cast %327 : vector<1xf32> to vector<1x1x1xf32>
    %329 = vector.extract %328[0, 0, 0] : f32 from vector<1x1x1xf32>
    %cst_135 = arith.constant 2.048000e+03 : f32
    %330 = arith.divf %329, %cst_135 : f32
    %331 = vector.broadcast %330 : f32 to vector<8x256xf32>
    %332 = arith.subf %325, %331 : vector<8x256xf32>
    %333 = arith.mulf %332, %332 : vector<8x256xf32>
    %334 = vector.shape_cast %333 : vector<8x256xf32> to vector<1x8x256xf32>
    %cst_136 = arith.constant dense<0.000000e+00> : vector<1xf32>
    %335 = vector.multi_reduction <add>, %334, %cst_136 [1, 2] : vector<1x8x256xf32> to vector<1xf32>
    %336 = vector.shape_cast %335 : vector<1xf32> to vector<1x1x1xf32>
    %337 = vector.extract %336[0, 0, 0] : f32 from vector<1x1x1xf32>
    %cst_137 = arith.constant 2.048000e+03 : f32
    %338 = arith.divf %337, %cst_137 : f32
    %cst_138 = arith.constant 9.99999974E-6 : f32
    %339 = arith.addf %338, %cst_138 : f32
    %340 = math.rsqrt %339 : f32
    %341 = vector.broadcast %340 : f32 to vector<8x256xf32>
    %342 = arith.mulf %332, %341 : vector<8x256xf32>
    %343 = vector.broadcast %218 : vector<8x1xf32> to vector<8x256xf32>
    %344 = arith.mulf %342, %343 : vector<8x256xf32>
    %345 = vector.broadcast %219 : vector<8x1xf32> to vector<8x256xf32>
    %346 = arith.addf %344, %345 : vector<8x256xf32>
    %cst_139 = arith.constant 0.000000e+00 : f32
    %347 = vector.broadcast %cst_139 : f32 to vector<8x256xf32>
    %348 = arith.maximumf %346, %347 : vector<8x256xf32>
    %c0_140 = arith.constant 0 : index
    %c0_141 = arith.constant 0 : index
    %c0_142 = arith.constant 0 : index
    %349 = vector.load %arg5[%c0_140, %c0_141, %c0_142] : memref<1x8x256xf32, #tpu.memory_space<vmem>>, vector<1x8x256xf32>
    %350 = vector.shape_cast %349 : vector<1x8x256xf32> to vector<8x256xf32>
    %351 = vector.shape_cast %348 : vector<8x256xf32> to vector<1x8x256xf32>
    tpu.vector_store %arg5[%c0_140, %c0_141, %c0_142], %351 {strides = array<i32>} : memref<1x8x256xf32, #tpu.memory_space<vmem>>, vector<1x8x256xf32>,
    return
  }
  func.func @transform_0(%arg0: i32) -> (i32, i32, i32) {
    %c0_i32 = arith.constant 0 : i32
    %c0_i32_0 = arith.constant 0 : i32
    %c0_i32_1 = arith.constant 0 : i32
    return %arg0, %c0_i32, %c0_i32_0 : i32, i32, i32
  }
  func.func @transform_1(%arg0: i32) -> (i32, i32, i32) {
    %c0_i32 = arith.constant 0 : i32
    %c0_i32_0 = arith.constant 0 : i32
    %c0_i32_1 = arith.constant 0 : i32
    return %arg0, %c0_i32, %c0_i32_0 : i32, i32, i32
  }
  func.func @transform_2(%arg0: i32) -> (i32, i32) {
    %c0_i32 = arith.constant 0 : i32
    %c0_i32_0 = arith.constant 0 : i32
    %c0_i32_1 = arith.constant 0 : i32
    return %c0_i32, %c0_i32_0 : i32, i32
  }
  func.func @transform_3(%arg0: i32) -> (i32, i32) {
    %c0_i32 = arith.constant 0 : i32
    %c0_i32_0 = arith.constant 0 : i32
    %c0_i32_1 = arith.constant 0 : i32
    return %c0_i32, %c0_i32_0 : i32, i32
  }
  func.func @transform_4(%arg0: i32) -> (i32, i32, i32) {
    %c0_i32 = arith.constant 0 : i32
    %c0_i32_0 = arith.constant 0 : i32
    %c0_i32_1 = arith.constant 0 : i32
    return %arg0, %c0_i32, %c0_i32_0 : i32, i32, i32
  }
  func.func @transform_5(%arg0: i32) -> (i32, i32, i32) {
    %c0_i32 = arith.constant 0 : i32
    %c0_i32_0 = arith.constant 0 : i32
    %c0_i32_1 = arith.constant 0 : i32
    return %arg0, %c0_i32, %c0_i32_0 : i32, i32, i32
  }
}

</mosaic_0001>

<llo_original>
// kernel: fdm_expand_block_new_forward.1
$region0: #{fdm_expand_block_new_forward.1}
  #allocation0 [shape = 'u32[]', space=smem, size = 0x4, offset = 0x4, fixed_abs, tag = 'smem constant byte address 0x4 - core index']
  #allocation1 [shape = 'u32[144,128]{1,0:T(1,128)}', space=vmem, size = 0x12000, scoped, tag = 'internal scratch']
  #allocation2 [shape = 'f32[144,256]{1,0:T(8,128)}', space=vmem, size = 0x24000, scoped, tag = 'scratch operand']
  %s0 = inlined_call_operand.vmem [shape: f32[2,8,256], index: 0, kind: input, shape index: {}]
  %s1 = inlined_call_operand.vmem [shape: f32[2,1,256], index: 1, kind: input, shape index: {}]
  %s2 = inlined_call_operand.vmem [shape: f32[8,144], index: 2, kind: input, shape index: {}]
  %s3 = inlined_call_operand.vmem [shape: f32[24,1], index: 3, kind: input, shape index: {}]
  %s4 = inlined_call_operand.vmem [shape: f32[2,8,256], index: 4, kind: output, shape index: {0}]
  %s5 = inlined_call_operand.vmem [shape: f32[2,1,256], index: 5, kind: output, shape index: {1}]
  %6 = xla_tuple %s4, %s5
  %s7 = sld [smem:[#allocation0]]
  $region61: #{fdm_expand_block_new_forward.1} parent=0
    _
  %s9 = ssub.s32 1, %s7
  %s10 = scalar_select 0, %s9, %s7
  loop: start=0, step=1, limit=4
  $region2: #{fdm_expand_block_new_forward.1} parent=0 // loop_pre_header
    _
  $region3: #{fdm_expand_block_new_forward.1} parent=0 // loop_header
    %s12 = sphi 0, %s16
    %p13 = scmp.ge.s32.totalorder %s12, 4
    %s22 = sphi 0, %s24
    %s25 = sphi 0, %s22
    %s26 = sphi 0, %s25
    %s42 = sphi 0, %s26
    %s48 = sphi 0, %s50
    %s51 = sphi 0, %s48
    %s52 = sphi 0, %s51
    %s68 = sphi 0, %s52
    %s72 = sphi 0, %s72
    %s74 = sphi 0, %s72
    %s75 = sphi 0, %s74
    %s89 = sphi 0, %s75
    %s93 = sphi 0, %s93
    %s95 = sphi 0, %s93
    %s96 = sphi 0, %s95
    %s110 = sphi 0, %s96
    %s116 = sphi 0, %s118
    %s119 = sphi 0, %s116
    %s120 = sphi 0, %s119
    %s136 = sphi 0, %s120
    %s142 = sphi 0, %s144
    %s145 = sphi 0, %s142
    %s146 = sphi 0, %s145
    %s162 = sphi 0, %s146
  $region4: #{fdm_expand_block_new_forward.1} parent=0 // loop_header_branch
    %15 = sbr.rel (%p13) target = $region8
  $region5: #{fdm_expand_block_new_forward.1} parent=0 // loop_body
    %s17 = ssub.s32 %s12, 1
    %s18 = ssub.s32 %s12, 2
    %s19 = sadd.s32 %s12, 1
    %s20 = ssub.s32 %s12, %s19
    %p21 = scmp.eq.s32.totalorder %s20, 0
    %s23 = sadd.s32 %s22, 1
    %s24 = scalar_select %p21, %s22, %s23
    %p27 = pneg %p21
    %p28 = scmp.eq.s32.totalorder %s12, 1
    %p29 = por %p27, %p28
    %p30 = scmp.ne.s32.totalorder %s22, %s25
    %p31 = scmp.eq.s32.totalorder %s12, 0
    %p32 = por %p30, %p31
    %p33 = scmp.ne.s32.totalorder %s22, %s25
    %p34 = scmp.eq.s32.totalorder %s17, 1
    %p35 = por %p33, %p34
    %p36 = scmp.ne.s32.totalorder %s25, %s26
    %p37 = scmp.eq.s32.totalorder %s17, 0
    %p38 = por %p36, %p37
    %p39 = scmp.ne.s32.totalorder %s25, %s26
    %p40 = scmp.eq.s32.totalorder %s18, 1
    %p41 = por %p39, %p40
    %p43 = scmp.ne.s32.totalorder %s26, %s42
    %p44 = scmp.eq.s32.totalorder %s18, 0
    %p45 = por %p43, %p44
    %s46 = ssub.s32 %s12, %s19
    %p47 = scmp.eq.s32.totalorder %s46, 0
    %s49 = sadd.s32 %s48, 1
    %s50 = scalar_select %p47, %s48, %s49
    %p53 = pneg %p47
    %p54 = scmp.eq.s32.totalorder %s12, 1
    %p55 = por %p53, %p54
    %p56 = scmp.ne.s32.totalorder %s48, %s51
    %p57 = scmp.eq.s32.totalorder %s12, 0
    %p58 = por %p56, %p57
    %p59 = scmp.ne.s32.totalorder %s48, %s51
    %p60 = scmp.eq.s32.totalorder %s17, 1
    %p61 = por %p59, %p60
    %p62 = scmp.ne.s32.totalorder %s51, %s52
    %p63 = scmp.eq.s32.totalorder %s17, 0
    %p64 = por %p62, %p63
    %p65 = scmp.ne.s32.totalorder %s51, %s52
    %p66 = scmp.eq.s32.totalorder %s18, 1
    %p67 = por %p65, %p66
    %p69 = scmp.ne.s32.totalorder %s52, %s68
    %p70 = scmp.eq.s32.totalorder %s18, 0
    %p71 = por %p69, %p70
    %s73 = sadd.s32 %s72, 1
    %p76 = scmp.eq.s32.totalorder %s12, 1
    %p77 = scmp.ne.s32.totalorder %s72, %s74
    %p78 = scmp.eq.s32.totalorder %s12, 0
    %p79 = por %p77, %p78
    %p80 = scmp.ne.s32.totalorder %s72, %s74
    %p81 = scmp.eq.s32.totalorder %s17, 1
    %p82 = por %p80, %p81
    %p83 = scmp.ne.s32.totalorder %s74, %s75
    %p84 = scmp.eq.s32.totalorder %s17, 0
    %p85 = por %p83, %p84
    %p86 = scmp.ne.s32.totalorder %s74, %s75
    %p87 = scmp.eq.s32.totalorder %s18, 1
    %p88 = por %p86, %p87
    %p90 = scmp.ne.s32.totalorder %s75, %s89
    %p91 = scmp.eq.s32.totalorder %s18, 0
    %p92 = por %p90, %p91
    %s94 = sadd.s32 %s93, 1
    %p97 = scmp.eq.s32.totalorder %s12, 1
    %p98 = scmp.ne.s32.totalorder %s93, %s95
    %p99 = scmp.eq.s32.totalorder %s12, 0
    %p100 = por %p98, %p99
    %p101 = scmp.ne.s32.totalorder %s93, %s95
    %p102 = scmp.eq.s32.totalorder %s17, 1
    %p103 = por %p101, %p102
    %p104 = scmp.ne.s32.totalorder %s95, %s96
    %p105 = scmp.eq.s32.totalorder %s17, 0
    %p106 = por %p104, %p105
    %p107 = scmp.ne.s32.totalorder %s95, %s96
    %p108 = scmp.eq.s32.totalorder %s18, 1
    %p109 = por %p107, %p108
    %p111 = scmp.ne.s32.totalorder %s96, %s110
    %p112 = scmp.eq.s32.totalorder %s18, 0
    %p113 = por %p111, %p112
    %s114 = ssub.s32 %s12, %s19
    %p115 = scmp.eq.s32.totalorder %s114, 0
    %s117 = sadd.s32 %s116, 1
    %s118 = scalar_select %p115, %s116, %s117
    %p121 = pneg %p115
    %p122 = scmp.eq.s32.totalorder %s12, 1
    %p123 = por %p121, %p122
    %p124 = scmp.ne.s32.totalorder %s116, %s119
    %p125 = scmp.eq.s32.totalorder %s12, 0
    %p126 = por %p124, %p125
    %p127 = scmp.ne.s32.totalorder %s116, %s119
    %p128 = scmp.eq.s32.totalorder %s17, 1
    %p129 = por %p127, %p128
    %p130 = scmp.ne.s32.totalorder %s119, %s120
    %p131 = scmp.eq.s32.totalorder %s17, 0
    %p132 = por %p130, %p131
    %p133 = scmp.ne.s32.totalorder %s119, %s120
    %p134 = scmp.eq.s32.totalorder %s18, 1
    %p135 = por %p133, %p134
    %p137 = scmp.ne.s32.totalorder %s120, %s136
    %p138 = scmp.eq.s32.totalorder %s18, 0
    %p139 = por %p137, %p138
    %s140 = ssub.s32 %s12, %s19
    %p141 = scmp.eq.s32.totalorder %s140, 0
    %s143 = sadd.s32 %s142, 1
    %s144 = scalar_select %p141, %s142, %s143
    %p147 = pneg %p141
    %p148 = scmp.eq.s32.totalorder %s12, 1
    %p149 = por %p147, %p148
    %p150 = scmp.ne.s32.totalorder %s142, %s145
    %p151 = scmp.eq.s32.totalorder %s12, 0
    %p152 = por %p150, %p151
    %p153 = scmp.ne.s32.totalorder %s142, %s145
    %p154 = scmp.eq.s32.totalorder %s17, 1
    %p155 = por %p153, %p154
    %p156 = scmp.ne.s32.totalorder %s145, %s146
    %p157 = scmp.eq.s32.totalorder %s17, 0
    %p158 = por %p156, %p157
    %p159 = scmp.ne.s32.totalorder %s145, %s146
    %p160 = scmp.eq.s32.totalorder %s18, 1
    %p161 = por %p159, %p160
    %p163 = scmp.ne.s32.totalorder %s146, %s162
    %p164 = scmp.eq.s32.totalorder %s18, 0
    %p165 = por %p163, %p164
    %p166 = scmp.le.s32.totalorder 1, %s12
    %p167 = scmp.lt.s32.totalorder %s12, 3
    %p168 = pnand %p166, %p167
    %p169 = pneg %p168
    // Predicated region
    $region9: #{fdm_expand_block_new_forward.1} parent=5 // pred_check
      _
    $region10: #{fdm_expand_block_new_forward.1} parent=5 // pred_check_branch
      %171 = sbr.rel (%p168) target = $region12
    $region11: #{fdm_expand_block_new_forward.1} parent=5 // pred_region
      %s172 = ssub.s32 %s12, 1
      // Predicated region
      $region13: #{fdm_expand_block_new_forward.1} parent=11 // pred_check
        %p173 = pneg %p85
      $region14: #{fdm_expand_block_new_forward.1} parent=11 // pred_check_branch
        %175 = sbr.rel (%p173) target = $region16
      $region15: #{fdm_expand_block_new_forward.1} parent=11 // pred_region
        _
      $region16: #{fdm_expand_block_new_forward.1} parent=11 // pred_fallthru
        _
      // Predicated region
      $region17: #{fdm_expand_block_new_forward.1} parent=11 // pred_check
        %p176 = pneg %p106
      $region18: #{fdm_expand_block_new_forward.1} parent=11 // pred_check_branch
        %178 = sbr.rel (%p176) target = $region20
      $region19: #{fdm_expand_block_new_forward.1} parent=11 // pred_region
        _
      $region20: #{fdm_expand_block_new_forward.1} parent=11 // pred_fallthru
        _
    $region12: #{fdm_expand_block_new_forward.1} parent=5 // pred_fallthru
      _
    %p179 = scmp.lt.s32.totalorder %s12, 2
    // Predicated region
    $region21: #{fdm_expand_block_new_forward.1} parent=5 // pred_check
      %p180 = pneg %p179
    $region22: #{fdm_expand_block_new_forward.1} parent=5 // pred_check_branch
      %182 = sbr.rel (%p180) target = $region24
    $region23: #{fdm_expand_block_new_forward.1} parent=5 // pred_region
      // Predicated region
      $region25: #{fdm_expand_block_new_forward.1} parent=23 // pred_check
        %p183 = pneg %p32
      $region26: #{fdm_expand_block_new_forward.1} parent=23 // pred_check_branch
        %185 = sbr.rel (%p183) target = $region28
      $region27: #{fdm_expand_block_new_forward.1} parent=23 // pred_region
        %p186 = scmp.lt.s32.totalorder %s12, 1
        %s187 = scalar_select %p186, %s12, 1
        %s188 = smul.addr %s187, 2
        %s189 = smul.addr %s188, 8
        %s190 = scalar_lea.vmem %s0, %s189
      $region28: #{fdm_expand_block_new_forward.1} parent=23 // pred_fallthru
        _
      // Predicated region
      $region29: #{fdm_expand_block_new_forward.1} parent=23 // pred_check
        %p191 = pneg %p58
      $region30: #{fdm_expand_block_new_forward.1} parent=23 // pred_check_branch
        %193 = sbr.rel (%p191) target = $region32
      $region31: #{fdm_expand_block_new_forward.1} parent=23 // pred_region
        %p194 = scmp.lt.s32.totalorder %s12, 1
        %s195 = scalar_select %p194, %s12, 1
        %s196 = smul.addr %s195, 2
        %s197 = scalar_lea.vmem %s1, %s196
      $region32: #{fdm_expand_block_new_forward.1} parent=23 // pred_fallthru
        _
    $region24: #{fdm_expand_block_new_forward.1} parent=5 // pred_fallthru
      _
    %p198 = scmp.le.s32.totalorder 1, %s12
    %p199 = scmp.lt.s32.totalorder %s12, 3
    %p200 = pnand %p198, %p199
    %p201 = pneg %p200
    // Predicated region
    $region33: #{fdm_expand_block_new_forward.1} parent=5 // pred_check
      _
    $region34: #{fdm_expand_block_new_forward.1} parent=5 // pred_check_branch
      %203 = sbr.rel (%p200) target = $region36
    $region35: #{fdm_expand_block_new_forward.1} parent=5 // pred_region
      %s204 = ssub.s32 %s12, 1
      %p205 = scmp.lt.s32.totalorder %s17, 1
      %s206 = scalar_select %p205, %s17, 1
      %s207 = smul.addr %s206, 2
      %s208 = smul.addr %s207, 8
      %s209 = scalar_lea.vmem %s0, %s208
      %p210 = pneg %p38
      %p211 = pneg %p35
      %p212 = scmp.lt.s32.totalorder %s17, 1
      %s213 = scalar_select %p212, %s17, 1
      %s214 = smul.addr %s213, 2
      %s215 = scalar_lea.vmem %s1, %s214
      %p216 = pneg %p64
      %p217 = pneg %p61
      %p218 = pneg %p85
      %p219 = pneg %p82
      %p220 = pneg %p106
      %p221 = pneg %p103
      %p222 = pneg %p132
      %p223 = pneg %p129
      %p224 = scmp.lt.s32.totalorder %s17, 1
      %s225 = scalar_select %p224, %s17, 1
      %s226 = smul.addr %s225, 2
      %s227 = smul.addr %s226, 8
      %s228 = scalar_lea.vmem %s4, %s227
      %p229 = pneg %p158
      %p230 = pneg %p155
      %p231 = scmp.lt.s32.totalorder %s17, 1
      %s232 = scalar_select %p231, %s17, 1
      %s233 = smul.addr %s232, 2
      %s234 = scalar_lea.vmem %s5, %s233
      %p235 = scmp.lt.s32.totalorder %s17, 1
      %s236 = scalar_select %p235, %s17, 1
      %s237 = smul.addr %s236, 2
      %s238 = smul.addr %s237, 8
      %s239 = scalar_lea.vmem %s0, %s238
      %p240 = scmp.lt.s32.totalorder %s17, 1
      %s241 = scalar_select %p240, %s17, 1
      %s242 = smul.addr %s241, 2
      %s243 = scalar_lea.vmem %s1, %s242
      %p244 = scmp.lt.s32.totalorder %s17, 1
      %s245 = scalar_select %p244, %s17, 1
      %s246 = smul.addr %s245, 2
      %s247 = smul.addr %s246, 8
      %s248 = scalar_lea.vmem %s4, %s247
      %p249 = scmp.lt.s32.totalorder %s17, 1
      %s250 = scalar_select %p249, %s17, 1
      %s251 = smul.addr %s250, 2
      %s252 = scalar_lea.vmem %s5, %s251
      %v253 = vlaneseq
      %v254 = vand.u32 %v253, 127
      %v255 = vadd.s32 %v254, 128
      %vm256 = vcmp.lt.s32.totalorder %v254, 0
      %v257 = vsub.s32 0, %v254
      %v258 = vsel %vm256, %v257, %v254
      %v259 = vshrl.u32 %v258, 4
      %v260 = vand.u32 %v258, 15
      %v261 = vsub.s32 0, %v260
      %v262 = vsel %vm256, %v261, %v260
      %vm263 = vcmp.lt.s32.totalorder %v255, 0
      %v264 = vsub.s32 0, %v255
      %v265 = vsel %vm263, %v264, %v255
      %v266 = vshrl.u32 %v265, 4
      %v267 = vand.u32 %v265, 15
      %v268 = vsub.s32 0, %v267
      %v269 = vsel %vm263, %v268, %v267
      %vm270 = vcmp.ne.s32.totalorder %v262, 0
      %vm271 = vcmp.ne.s32.totalorder %v269, 0
      %vm272 = vcmp.lt.s32.totalorder %v262, 0
      %vm273 = vcmp.lt.s32.totalorder %v269, 0
      %vm274 = vmand %vm272, %vm270
      %vm275 = vmand %vm273, %vm271
      %v276 = vadd.s32 %v262, 16
      %v277 = vadd.s32 %v269, 16
      %v278 = vsel %vm274, %v276, %v262
      %v279 = vsel %vm275, %v277, %v269
      %v280 = vadd.s32 %v254, 4294967280
      %v281 = vadd.s32 %v255, 4294967280
      %vm282 = vcmp.ge.s32.totalorder %v280, 0
      %vm283 = vcmp.ge.s32.totalorder %v281, 0
      %vm284 = vcmp.lt.s32.totalorder %v280, 256
      %vm285 = vcmp.lt.s32.totalorder %v281, 256
      %vm286 = vmand %vm282, %vm284
      %vm287 = vmand %vm283, %vm285
      %v288 = vadd.s32 %v278, 4294967295
      %v289 = vadd.s32 %v279, 4294967295
      %vm290 = vcmp.ge.s32.totalorder %v288, 0
      %vm291 = vcmp.ge.s32.totalorder %v289, 0
      %vm292 = vmand %vm286, %vm290
      %vm293 = vmand %vm287, %vm291
      %vm294 = vcmp.lt.s32.totalorder %v288, 16
      %vm295 = vcmp.lt.s32.totalorder %v289, 16
      %vm296 = vmand %vm292, %vm294
      %vm297 = vmand %vm293, %vm295
      %v298 = vsel %vm296, 1.0, 0.0
      %v299 = vsel %vm297, 1.0, 0.0
      %vm300 = vcmp.ge.s32.totalorder %v278, 0
      %vm301 = vcmp.ge.s32.totalorder %v279, 0
      %vm302 = vmand %vm286, %vm300
      %vm303 = vmand %vm287, %vm301
      %vm304 = vcmp.lt.s32.totalorder %v278, 16
      %vm305 = vcmp.lt.s32.totalorder %v279, 16
      %vm306 = vmand %vm302, %vm304
      %vm307 = vmand %vm303, %vm305
      %v308 = vsel %vm306, 1.0, 0.0
      %v309 = vsel %vm307, 1.0, 0.0
      %v310 = vadd.s32 %v278, 1
      %v311 = vadd.s32 %v279, 1
      %vm312 = vcmp.ge.s32.totalorder %v310, 0
      %vm313 = vcmp.ge.s32.totalorder %v311, 0
      %vm314 = vmand %vm286, %vm312
      %vm315 = vmand %vm287, %vm313
      %vm316 = vcmp.lt.s32.totalorder %v310, 16
      %vm317 = vcmp.lt.s32.totalorder %v311, 16
      %vm318 = vmand %vm314, %vm316
      %vm319 = vmand %vm315, %vm317
      %v320 = vsel %vm318, 1.0, 0.0
      %v321 = vsel %vm319, 1.0, 0.0
      %vm322 = vcmp.ge.s32.totalorder %v254, 0
      %vm323 = vcmp.ge.s32.totalorder %v255, 0
      %vm324 = vcmp.lt.s32.totalorder %v254, 256
      %vm325 = vcmp.lt.s32.totalorder %v255, 256
      %vm326 = vmand %vm322, %vm324
      %vm327 = vmand %vm323, %vm325
      %vm328 = vmand %vm326, %vm290
      %vm329 = vmand %vm327, %vm291
      %vm330 = vmand %vm328, %vm294
      %vm331 = vmand %vm329, %vm295
      %v332 = vsel %vm330, 1.0, 0.0
      %v333 = vsel %vm331, 1.0, 0.0
      %vm334 = vmand %vm326, %vm300
      %vm335 = vmand %vm327, %vm301
      %vm336 = vmand %vm334, %vm304
      %vm337 = vmand %vm335, %vm305
      %v338 = vsel %vm336, 1.0, 0.0
      %v339 = vsel %vm337, 1.0, 0.0
      %vm340 = vmand %vm326, %vm312
      %vm341 = vmand %vm327, %vm313
      %vm342 = vmand %vm340, %vm316
      %vm343 = vmand %vm341, %vm317
      %v344 = vsel %vm342, 1.0, 0.0
      %v345 = vsel %vm343, 1.0, 0.0
      %v346 = vadd.s32 %v254, 16
      %v347 = vadd.s32 %v255, 16
      %vm348 = vcmp.ge.s32.totalorder %v346, 0
      %vm349 = vcmp.ge.s32.totalorder %v347, 0
      %vm350 = vcmp.lt.s32.totalorder %v346, 256
      %vm351 = vcmp.lt.s32.totalorder %v347, 256
      %vm352 = vmand %vm348, %vm350
      %vm353 = vmand %vm349, %vm351
      %vm354 = vmand %vm352, %vm290
      %vm355 = vmand %vm353, %vm291
      %vm356 = vmand %vm354, %vm294
      %vm357 = vmand %vm355, %vm295
      %v358 = vsel %vm356, 1.0, 0.0
      %v359 = vsel %vm357, 1.0, 0.0
      %vm360 = vmand %vm352, %vm300
      %vm361 = vmand %vm353, %vm301
      %vm362 = vmand %vm360, %vm304
      %vm363 = vmand %vm361, %vm305
      %v364 = vsel %vm362, 1.0, 0.0
      %v365 = vsel %vm363, 1.0, 0.0
      %vm366 = vmand %vm352, %vm312
      %vm367 = vmand %vm353, %vm313
      %vm368 = vmand %vm366, %vm316
      %vm369 = vmand %vm367, %vm317
      %v370 = vsel %vm368, 1.0, 0.0
      %v371 = vsel %vm369, 1.0, 0.0
      %v372 = vld [vmem:[%s3] sm:$0xff]
      %v373 = vld [vmem:[%s3 + $0x8] sm:$0xff]
      %v374 = vld [vmem:[%s3 + $0x10] sm:$0xff]
      %v375 = vld [vmem:[%s239] sm:$0xff]
      %v376 = vld [vmem:[%s239 + $0x8] sm:$0xff]
      %v377 = vld [vmem:[%s243] sm:$0x3]
      %v378 = vmul.f32 %v375, %v375
      %v379 = vmul.f32 %v376, %v376
      %v380 = vrot.slane %v378, 4
      %v381 = vadd.f32 %v378, %v380
      %v382 = vrot.slane %v381, 2
      %v383 = vadd.f32 %v381, %v382
      %v384 = vrot.slane %v383, 1
      %v385 = vadd.f32 %v383, %v384
      %v386 = vrot.slane %v379, 4
      %v387 = vadd.f32 %v379, %v386
      %v388 = vrot.slane %v387, 2
      %v389 = vadd.f32 %v387, %v388
      %v390 = vrot.slane %v389, 1
      %v391 = vadd.f32 %v389, %v390
      %v392 = vrsqrt.pop %v385
      %v393 = vmul.f32 %v385, %v392
      %vm394 = vcmp.eq.f32.partialorder %v385, inf
      %v395 = vsel %vm394, %v385, %v393
      %vm396 = vcmp.eq.f32.partialorder %v385, 0.0
      %v397 = vand.u32 %v385, 2147483648
      %v398 = vsel %vm396, %v397, %v395
      %v399 = vrsqrt.pop %v391
      %v400 = vmul.f32 %v391, %v399
      %vm401 = vcmp.eq.f32.partialorder %v391, inf
      %v402 = vsel %vm401, %v391, %v400
      %vm403 = vcmp.eq.f32.partialorder %v391, 0.0
      %v404 = vand.u32 %v391, 2147483648
      %v405 = vsel %vm403, %v404, %v402
      %v406 = vmax.f32 %v398, 1e-08
      %v407 = vmax.f32 %v405, 1e-08
      %v408 = vrcp.pop %v406
      %v409 = vmul.f32 1.0, %v408
      %v410 = vrcp.pop %v407
      %v411 = vmul.f32 1.0, %v410
      %v412 = vmul.f32 %v375, %v409
      %v413 = vmul.f32 %v376, %v411
      %v415 = vlaneseq
      %v416 = vshrl.u32 %v415, 7
      %v417 = vsub.s32 0, %v416
      %v418 = vrot.slane %v377, %v417
      %v419 = vlaneseq
      %v420 = vshrl.u32 %v419, 7
      %v421 = vsub.s32 1, %v420
      %v422 = vrot.slane %v377, %v421
      %vm425 = vcmask 1040384
      %v426 = vsel %vm425, %v418, -inf
      %v427 = vsel %vm425, %v422, -inf
      %v428 = vmax.f32 %v426, %v427
      %429 = vmax.xlane.f32.xlu0 %v428
      %v430 = vpop.xlane.xlu0 %429
      %v431 = vrot.slane %v430, 4
      %v432 = vmax.f32 %v430, %v431
      %v433 = vrot.slane %v432, 2
      %v434 = vmax.f32 %v432, %v433
      %v435 = vrot.slane %v434, 1
      %v436 = vmax.f32 %v434, %v435
      %s437 = vtos %v436
      %v438 = vrcp.pop 3.0
      %s439 = vtos %v438
      %s440 = smul.f32 %s437, %s439
      %s441 = smin.f32 %s440, 0.5
      %v442 = vstv %s441
      %vm443 = vcmp.ge.f32.partialorder %v377, %v442
      %v444 = vsel %vm443, 0.0, 1.0
      %v446 = vlaneseq
      %v447 = vshrl.u32 %v446, 7
      %v448 = vsub.s32 0, %v447
      %v449 = vrot.slane %v444, %v448
      %v450 = vlaneseq
      %v451 = vshrl.u32 %v450, 7
      %v452 = vsub.s32 1, %v451
      %v453 = vrot.slane %v444, %v452
      %v456 = vlaneseq
      %vm457 = vcmp.ge.s32.totalorder %v456, 0
      %vm458 = vcmp.lt.s32.totalorder %v456, 256
      %vm459 = vmand %vm457, %vm458
      %460 = vst.msk [vmem:[%s252] sm:$0x3] %vm459, -1.0
      %p461 = scmp.ge.f32.partialorder %s437, %s441
      // Predicated region
      $region37: #{fdm_expand_block_new_forward.1} parent=35 // pred_check
        %p462 = pneg %p461
      $region38: #{fdm_expand_block_new_forward.1} parent=35 // pred_check_branch
        %464 = sbr.rel (%p462) target = $region40
      $region39: #{fdm_expand_block_new_forward.1} parent=35 // pred_region
        %465 = vxpose.xlu0.b32.start [1/16] %v412, 128
        %466 = vxpose.xlu0.b32.cont [2/16] %v449, 128
        %467 = vxpose.xlu0.b32.cont [3/16] 0.0, 128
        %468 = vxpose.xlu0.b32.cont [4/16] 0.0, 128
        %469 = vxpose.xlu0.b32.cont [5/16] 0.0, 128
        %470 = vxpose.xlu0.b32.cont [6/16] 0.0, 128
        %471 = vxpose.xlu0.b32.cont [7/16] 0.0, 128
        %472 = vxpose.xlu0.b32.cont [8/16] 0.0, 128
        %473 = vxpose.xlu0.b32.cont [9/16] 0.0, 128
        %474 = vxpose.xlu0.b32.cont [10/16] 0.0, 128
        %475 = vxpose.xlu0.b32.cont [11/16] 0.0, 128
        %476 = vxpose.xlu0.b32.cont [12/16] 0.0, 128
        %477 = vxpose.xlu0.b32.cont [13/16] 0.0, 128
        %478 = vxpose.xlu0.b32.cont [14/16] 0.0, 128
        %479 = vxpose.xlu0.b32.cont [15/16] 0.0, 128
        %480 = vxpose.xlu0.b32.end [16/16] 0.0, 128
        %v481 = vpop.trf.xlu0
        %v482 = vpop.trf.xlu0
        %v483 = vpop.trf.xlu0
        %v484 = vpop.trf.xlu0
        %v485 = vpop.trf.xlu0
        %v486 = vpop.trf.xlu0
        %v487 = vpop.trf.xlu0
        %v488 = vpop.trf.xlu0
        %v489 = vpop.trf.xlu0
        %v490 = vpop.trf.xlu0
        %v491 = vpop.trf.xlu0
        %v492 = vpop.trf.xlu0
        %v493 = vpop.trf.xlu0
        %v494 = vpop.trf.xlu0
        %v495 = vpop.trf.xlu0
        %v496 = vpop.trf.xlu0
        %497 = vxpose.xlu0.b32.start [1/16] %v413, 128
        %498 = vxpose.xlu0.b32.cont [2/16] %v453, 128
        %499 = vxpose.xlu0.b32.cont [3/16] 0.0, 128
        %500 = vxpose.xlu0.b32.cont [4/16] 0.0, 128
        %501 = vxpose.xlu0.b32.cont [5/16] 0.0, 128
        %502 = vxpose.xlu0.b32.cont [6/16] 0.0, 128
        %503 = vxpose.xlu0.b32.cont [7/16] 0.0, 128
        %504 = vxpose.xlu0.b32.cont [8/16] 0.0, 128
        %505 = vxpose.xlu0.b32.cont [9/16] 0.0, 128
        %506 = vxpose.xlu0.b32.cont [10/16] 0.0, 128
        %507 = vxpose.xlu0.b32.cont [11/16] 0.0, 128
        %508 = vxpose.xlu0.b32.cont [12/16] 0.0, 128
        %509 = vxpose.xlu0.b32.cont [13/16] 0.0, 128
        %510 = vxpose.xlu0.b32.cont [14/16] 0.0, 128
        %511 = vxpose.xlu0.b32.cont [15/16] 0.0, 128
        %512 = vxpose.xlu0.b32.end [16/16] 0.0, 128
        %v513 = vpop.trf.xlu0
        %v514 = vpop.trf.xlu0
        %v515 = vpop.trf.xlu0
        %v516 = vpop.trf.xlu0
        %v517 = vpop.trf.xlu0
        %v518 = vpop.trf.xlu0
        %v519 = vpop.trf.xlu0
        %v520 = vpop.trf.xlu0
        %v521 = vpop.trf.xlu0
        %v522 = vpop.trf.xlu0
        %v523 = vpop.trf.xlu0
        %v524 = vpop.trf.xlu0
        %v525 = vpop.trf.xlu0
        %v526 = vpop.trf.xlu0
        %v527 = vpop.trf.xlu0
        %v528 = vpop.trf.xlu0
        %vm529 = vcmask 72704
        %v531 = vsel %vm529, %v481, 0
        %v534 = vsel %vm529, %v482, 0
        %v537 = vsel %vm529, %v483, 0
        %v540 = vsel %vm529, %v484, 0
        %v543 = vsel %vm529, %v485, 0
        %v546 = vsel %vm529, %v486, 0
        %v549 = vsel %vm529, %v487, 0
        %v552 = vsel %vm529, %v488, 0
        %v555 = vsel %vm529, %v489, 0
        %v558 = vsel %vm529, %v490, 0
        %v561 = vsel %vm529, %v491, 0
        %v564 = vsel %vm529, %v492, 0
        %v567 = vsel %vm529, %v493, 0
        %v570 = vsel %vm529, %v494, 0
        %v573 = vsel %vm529, %v495, 0
        %v576 = vsel %vm529, %v496, 0
        %v579 = vsel %vm529, %v513, 0
        %v582 = vsel %vm529, %v514, 0
        %v585 = vsel %vm529, %v515, 0
        %v588 = vsel %vm529, %v516, 0
        %v591 = vsel %vm529, %v517, 0
        %v594 = vsel %vm529, %v518, 0
        %v597 = vsel %vm529, %v519, 0
        %v600 = vsel %vm529, %v520, 0
        %v603 = vsel %vm529, %v521, 0
        %v606 = vsel %vm529, %v522, 0
        %v609 = vsel %vm529, %v523, 0
        %v612 = vsel %vm529, %v524, 0
        %v615 = vsel %vm529, %v525, 0
        %v618 = vsel %vm529, %v526, 0
        %v621 = vsel %vm529, %v527, 0
        %v624 = vsel %vm529, %v528, 0
        %v627 = vsel %vm425, -4.0, 0
        %629 = vmatprep.subr.mxu0 0.0
        %630 = vmatpush1.msra.mxu0 0.0
        %631 = vmatprep.subr.mxu0 0.0
        %632 = vmatpush1.msra.mxu0 0.0
        %633 = vmatprep.subr.mxu0 0.0
        %634 = vmatpush1.msra.mxu0 0.0
        %635 = vmatprep.subr.mxu0 0.0
        %636 = vmatpush1.msra.mxu0 0.0
        %637 = vmatprep.subr.mxu0 0.0
        %638 = vmatpush1.msra.mxu0 0.0
        %639 = vmatprep.subr.mxu0 0.0
        %640 = vmatpush1.msra.mxu0 0.0
        %641 = vmatprep.subr.mxu0 0.0
        %642 = vmatpush1.msra.mxu0 0.0
        %643 = vmatprep.subr.mxu0 0.0
        %644 = vmatpush1.msra.mxu0 0.0
        %645 = vmatprep.subr.mxu0 0.0
        %646 = vmatpush1.msra.mxu0 0.0
        %647 = vmatprep.subr.mxu0 0.0
        %648 = vmatpush1.msra.mxu0 0.0
        %649 = vmatprep.subr.mxu0 0.0
        %650 = vmatpush1.msra.mxu0 0.0
        %651 = vmatprep.subr.mxu0 0.0
        %652 = vmatpush1.msra.mxu0 0.0
        %653 = vmatprep.subr.mxu0 0.0
        %654 = vmatpush1.msra.mxu0 0.0
        %655 = vmatprep.subr.mxu0 0.0
        %656 = vmatpush1.msra.mxu0 0.0
        %657 = vmatprep.subr.mxu0 %v627
        %658 = vmatpush1.msra.mxu0 %v627
        %659 = vmatprep.subr.mxu0 %v413
        %660 = vmatpush1.msra.mxu0 %v412
        %661 = vmatprep.subr.mxu0 0.0
        %662 = vmatpush2.msra.mxu0 0.0
        %663 = vmatprep.subr.mxu0 0.0
        %664 = vmatpush2.msra.mxu0 0.0
        %665 = vmatprep.subr.mxu0 0.0
        %666 = vmatpush2.msra.mxu0 0.0
        %667 = vmatprep.subr.mxu0 0.0
        %668 = vmatpush2.msra.mxu0 0.0
        %669 = vmatprep.subr.mxu0 0.0
        %670 = vmatpush2.msra.mxu0 0.0
        %671 = vmatprep.subr.mxu0 0.0
        %672 = vmatpush2.msra.mxu0 0.0
        %673 = vmatprep.subr.mxu0 0.0
        %674 = vmatpush2.msra.mxu0 0.0
        %675 = vmatprep.subr.mxu0 0.0
        %676 = vmatpush2.msra.mxu0 0.0
        %677 = vmatprep.subr.mxu0 0.0
        %678 = vmatpush2.msra.mxu0 0.0
        %679 = vmatprep.subr.mxu0 0.0
        %680 = vmatpush2.msra.mxu0 0.0
        %681 = vmatprep.subr.mxu0 0.0
        %682 = vmatpush2.msra.mxu0 0.0
        %683 = vmatprep.subr.mxu0 0.0
        %684 = vmatpush2.msra.mxu0 0.0
        %685 = vmatprep.subr.mxu0 0.0
        %686 = vmatpush2.msra.mxu0 0.0
        %687 = vmatprep.subr.mxu0 0.0
        %688 = vmatpush2.msra.mxu0 0.0
        %689 = vmatprep.subr.mxu0 0.0
        %690 = vmatpush2.msra.mxu0 0.0
        %691 = vmatprep.subr.mxu0 0.0
        %692 = vmatpush2.msra.mxu0 0.0
        %693 = vmatprep.mubr.f32.mxu0 0.0
        %694 = vmatmul.mubr.f32.gmra.mxu0 %v531
        %v695 = vpop.f32.mrf.mxu0
        %v696 = vadd.f32 0.0, %v695
        %v697 = vpop.f32.mrf.mxu0
        %v698 = vadd.f32 0.0, %v697
        %699 = vmatprep.mubr.f32.mxu0 0.0
        %700 = vmatmul.mubr.f32.gmra.mxu0 %v534
        %v701 = vpop.f32.mrf.mxu0
        %v702 = vadd.f32 0.0, %v701
        %v703 = vpop.f32.mrf.mxu0
        %v704 = vadd.f32 0.0, %v703
        %705 = vmatprep.mubr.f32.mxu0 0.0
        %706 = vmatmul.mubr.f32.gmra.mxu0 %v537
        %v707 = vpop.f32.mrf.mxu0
        %v708 = vadd.f32 0.0, %v707
        %v709 = vpop.f32.mrf.mxu0
        %v710 = vadd.f32 0.0, %v709
        %711 = vmatprep.mubr.f32.mxu0 0.0
        %712 = vmatmul.mubr.f32.gmra.mxu0 %v540
        %v713 = vpop.f32.mrf.mxu0
        %v714 = vadd.f32 0.0, %v713
        %v715 = vpop.f32.mrf.mxu0
        %v716 = vadd.f32 0.0, %v715
        %717 = vmatprep.mubr.f32.mxu0 0.0
        %718 = vmatmul.mubr.f32.gmra.mxu0 %v543
        %v719 = vpop.f32.mrf.mxu0
        %v720 = vadd.f32 0.0, %v719
        %v721 = vpop.f32.mrf.mxu0
        %v722 = vadd.f32 0.0, %v721
        %723 = vmatprep.mubr.f32.mxu0 0.0
        %724 = vmatmul.mubr.f32.gmra.mxu0 %v546
        %v725 = vpop.f32.mrf.mxu0
        %v726 = vadd.f32 0.0, %v725
        %v727 = vpop.f32.mrf.mxu0
        %v728 = vadd.f32 0.0, %v727
        %729 = vmatprep.mubr.f32.mxu0 0.0
        %730 = vmatmul.mubr.f32.gmra.mxu0 %v549
        %v731 = vpop.f32.mrf.mxu0
        %v732 = vadd.f32 0.0, %v731
        %v733 = vpop.f32.mrf.mxu0
        %v734 = vadd.f32 0.0, %v733
        %735 = vmatprep.mubr.f32.mxu0 0.0
        %736 = vmatmul.mubr.f32.gmra.mxu0 %v552
        %v737 = vpop.f32.mrf.mxu0
        %v738 = vadd.f32 0.0, %v737
        %v739 = vpop.f32.mrf.mxu0
        %v740 = vadd.f32 0.0, %v739
        %741 = vmatprep.mubr.f32.mxu0 0.0
        %742 = vmatmul.mubr.f32.gmra.mxu0 %v555
        %v743 = vpop.f32.mrf.mxu0
        %v744 = vadd.f32 0.0, %v743
        %v745 = vpop.f32.mrf.mxu0
        %v746 = vadd.f32 0.0, %v745
        %747 = vmatprep.mubr.f32.mxu0 0.0
        %748 = vmatmul.mubr.f32.gmra.mxu0 %v558
        %v749 = vpop.f32.mrf.mxu0
        %v750 = vadd.f32 0.0, %v749
        %v751 = vpop.f32.mrf.mxu0
        %v752 = vadd.f32 0.0, %v751
        %753 = vmatprep.mubr.f32.mxu0 0.0
        %754 = vmatmul.mubr.f32.gmra.mxu0 %v561
        %v755 = vpop.f32.mrf.mxu0
        %v756 = vadd.f32 0.0, %v755
        %v757 = vpop.f32.mrf.mxu0
        %v758 = vadd.f32 0.0, %v757
        %759 = vmatprep.mubr.f32.mxu0 0.0
        %760 = vmatmul.mubr.f32.gmra.mxu0 %v564
        %v761 = vpop.f32.mrf.mxu0
        %v762 = vadd.f32 0.0, %v761
        %v763 = vpop.f32.mrf.mxu0
        %v764 = vadd.f32 0.0, %v763
        %765 = vmatprep.mubr.f32.mxu0 0.0
        %766 = vmatmul.mubr.f32.gmra.mxu0 %v567
        %v767 = vpop.f32.mrf.mxu0
        %v768 = vadd.f32 0.0, %v767
        %v769 = vpop.f32.mrf.mxu0
        %v770 = vadd.f32 0.0, %v769
        %771 = vmatprep.mubr.f32.mxu0 0.0
        %772 = vmatmul.mubr.f32.gmra.mxu0 %v570
        %v773 = vpop.f32.mrf.mxu0
        %v774 = vadd.f32 0.0, %v773
        %v775 = vpop.f32.mrf.mxu0
        %v776 = vadd.f32 0.0, %v775
        %777 = vmatprep.mubr.f32.mxu0 0.0
        %778 = vmatmul.mubr.f32.gmra.mxu0 %v573
        %v779 = vpop.f32.mrf.mxu0
        %v780 = vadd.f32 0.0, %v779
        %v781 = vpop.f32.mrf.mxu0
        %v782 = vadd.f32 0.0, %v781
        %783 = vmatprep.mubr.f32.mxu0 0.0
        %784 = vmatmul.mubr.f32.gmra.mxu0 %v576
        %v785 = vpop.f32.mrf.mxu0
        %v786 = vadd.f32 0.0, %v785
        %v787 = vpop.f32.mrf.mxu0
        %v788 = vadd.f32 0.0, %v787
        %789 = vmatprep.mubr.f32.mxu0 0.0
        %790 = vmatmul.mubr.f32.gmra.mxu0 %v579
        %v791 = vpop.f32.mrf.mxu0
        %v792 = vadd.f32 0.0, %v791
        %v793 = vpop.f32.mrf.mxu0
        %v794 = vadd.f32 0.0, %v793
        %795 = vmatprep.mubr.f32.mxu0 0.0
        %796 = vmatmul.mubr.f32.gmra.mxu0 %v582
        %v797 = vpop.f32.mrf.mxu0
        %v798 = vadd.f32 0.0, %v797
        %v799 = vpop.f32.mrf.mxu0
        %v800 = vadd.f32 0.0, %v799
        %801 = vmatprep.mubr.f32.mxu0 0.0
        %802 = vmatmul.mubr.f32.gmra.mxu0 %v585
        %v803 = vpop.f32.mrf.mxu0
        %v804 = vadd.f32 0.0, %v803
        %v805 = vpop.f32.mrf.mxu0
        %v806 = vadd.f32 0.0, %v805
        %807 = vmatprep.mubr.f32.mxu0 0.0
        %808 = vmatmul.mubr.f32.gmra.mxu0 %v588
        %v809 = vpop.f32.mrf.mxu0
        %v810 = vadd.f32 0.0, %v809
        %v811 = vpop.f32.mrf.mxu0
        %v812 = vadd.f32 0.0, %v811
        %813 = vmatprep.mubr.f32.mxu0 0.0
        %814 = vmatmul.mubr.f32.gmra.mxu0 %v591
        %v815 = vpop.f32.mrf.mxu0
        %v816 = vadd.f32 0.0, %v815
        %v817 = vpop.f32.mrf.mxu0
        %v818 = vadd.f32 0.0, %v817
        %819 = vmatprep.mubr.f32.mxu0 0.0
        %820 = vmatmul.mubr.f32.gmra.mxu0 %v594
        %v821 = vpop.f32.mrf.mxu0
        %v822 = vadd.f32 0.0, %v821
        %v823 = vpop.f32.mrf.mxu0
        %v824 = vadd.f32 0.0, %v823
        %825 = vmatprep.mubr.f32.mxu0 0.0
        %826 = vmatmul.mubr.f32.gmra.mxu0 %v597
        %v827 = vpop.f32.mrf.mxu0
        %v828 = vadd.f32 0.0, %v827
        %v829 = vpop.f32.mrf.mxu0
        %v830 = vadd.f32 0.0, %v829
        %831 = vmatprep.mubr.f32.mxu0 0.0
        %832 = vmatmul.mubr.f32.gmra.mxu0 %v600
        %v833 = vpop.f32.mrf.mxu0
        %v834 = vadd.f32 0.0, %v833
        %v835 = vpop.f32.mrf.mxu0
        %v836 = vadd.f32 0.0, %v835
        %837 = vmatprep.mubr.f32.mxu0 0.0
        %838 = vmatmul.mubr.f32.gmra.mxu0 %v603
        %v839 = vpop.f32.mrf.mxu0
        %v840 = vadd.f32 0.0, %v839
        %v841 = vpop.f32.mrf.mxu0
        %v842 = vadd.f32 0.0, %v841
        %843 = vmatprep.mubr.f32.mxu0 0.0
        %844 = vmatmul.mubr.f32.gmra.mxu0 %v606
        %v845 = vpop.f32.mrf.mxu0
        %v846 = vadd.f32 0.0, %v845
        %v847 = vpop.f32.mrf.mxu0
        %v848 = vadd.f32 0.0, %v847
        %849 = vmatprep.mubr.f32.mxu0 0.0
        %850 = vmatmul.mubr.f32.gmra.mxu0 %v609
        %v851 = vpop.f32.mrf.mxu0
        %v852 = vadd.f32 0.0, %v851
        %v853 = vpop.f32.mrf.mxu0
        %v854 = vadd.f32 0.0, %v853
        %855 = vmatprep.mubr.f32.mxu0 0.0
        %856 = vmatmul.mubr.f32.gmra.mxu0 %v612
        %v857 = vpop.f32.mrf.mxu0
        %v858 = vadd.f32 0.0, %v857
        %v859 = vpop.f32.mrf.mxu0
        %v860 = vadd.f32 0.0, %v859
        %861 = vmatprep.mubr.f32.mxu0 0.0
        %862 = vmatmul.mubr.f32.gmra.mxu0 %v615
        %v863 = vpop.f32.mrf.mxu0
        %v864 = vadd.f32 0.0, %v863
        %v865 = vpop.f32.mrf.mxu0
        %v866 = vadd.f32 0.0, %v865
        %867 = vmatprep.mubr.f32.mxu0 0.0
        %868 = vmatmul.mubr.f32.gmra.mxu0 %v618
        %v869 = vpop.f32.mrf.mxu0
        %v870 = vadd.f32 0.0, %v869
        %v871 = vpop.f32.mrf.mxu0
        %v872 = vadd.f32 0.0, %v871
        %873 = vmatprep.mubr.f32.mxu0 0.0
        %874 = vmatmul.mubr.f32.gmra.mxu0 %v621
        %v875 = vpop.f32.mrf.mxu0
        %v876 = vadd.f32 0.0, %v875
        %v877 = vpop.f32.mrf.mxu0
        %v878 = vadd.f32 0.0, %v877
        %879 = vmatprep.mubr.f32.mxu0 0.0
        %880 = vmatmul.mubr.f32.gmra.mxu0 %v624
        %v881 = vpop.f32.mrf.mxu0
        %v882 = vadd.f32 0.0, %v881
        %v883 = vpop.f32.mrf.mxu0
        %v884 = vadd.f32 0.0, %v883
        %885 = vdwg.mxu0
        %v886 = vld [vmem:[%s252] sm:$0x3]
        %v887 = vmax.f32 %v696, %v708
        %v888 = vmax.f32 %v702, %v714
        %v889 = vmax.f32 %v887, %v720
        %v890 = vmax.f32 %v888, %v726
        %v891 = vmax.f32 %v889, %v732
        %v892 = vmax.f32 %v890, %v738
        %v893 = vmax.f32 %v891, %v744
        %v894 = vmax.f32 %v892, %v750
        %v895 = vmax.f32 %v893, %v756
        %v896 = vmax.f32 %v894, %v762
        %v897 = vmax.f32 %v895, %v768
        %v898 = vmax.f32 %v896, %v774
        %v899 = vmax.f32 %v897, %v780
        %v900 = vmax.f32 %v898, %v786
        %v901 = vmax.f32 %v899, %v792
        %v902 = vmax.f32 %v900, %v798
        %v903 = vmax.f32 %v901, %v804
        %v904 = vmax.f32 %v902, %v810
        %v905 = vmax.f32 %v903, %v816
        %v906 = vmax.f32 %v904, %v822
        %v907 = vmax.f32 %v905, %v828
        %v908 = vmax.f32 %v906, %v834
        %v909 = vmax.f32 %v907, %v840
        %v910 = vmax.f32 %v908, %v846
        %v911 = vmax.f32 %v909, %v852
        %v912 = vmax.f32 %v910, %v858
        %v913 = vmax.f32 %v911, %v864
        %v914 = vmax.f32 %v912, %v870
        %v915 = vmax.f32 %v913, %v876
        %v916 = vmax.f32 %v914, %v882
        %v917 = vmax.f32 %v915, %v916
        %v918 = vrot.slane %v917, 4
        %v919 = vmax.f32 %v917, %v918
        %v920 = vrot.slane %v919, 2
        %v921 = vmax.f32 %v919, %v920
        %v922 = vrot.slane %v921, 1
        %v923 = vmax.f32 %v921, %v922
        %v924 = vmax.f32 %v698, %v710
        %v925 = vmax.f32 %v704, %v716
        %v926 = vmax.f32 %v924, %v722
        %v927 = vmax.f32 %v925, %v728
        %v928 = vmax.f32 %v926, %v734
        %v929 = vmax.f32 %v927, %v740
        %v930 = vmax.f32 %v928, %v746
        %v931 = vmax.f32 %v929, %v752
        %v932 = vmax.f32 %v930, %v758
        %v933 = vmax.f32 %v931, %v764
        %v934 = vmax.f32 %v932, %v770
        %v935 = vmax.f32 %v933, %v776
        %v936 = vmax.f32 %v934, %v782
        %v937 = vmax.f32 %v935, %v788
        %v938 = vmax.f32 %v936, %v794
        %v939 = vmax.f32 %v937, %v800
        %v940 = vmax.f32 %v938, %v806
        %v941 = vmax.f32 %v939, %v812
        %v942 = vmax.f32 %v940, %v818
        %v943 = vmax.f32 %v941, %v824
        %v944 = vmax.f32 %v942, %v830
        %v945 = vmax.f32 %v943, %v836
        %v946 = vmax.f32 %v944, %v842
        %v947 = vmax.f32 %v945, %v848
        %v948 = vmax.f32 %v946, %v854
        %v949 = vmax.f32 %v947, %v860
        %v950 = vmax.f32 %v948, %v866
        %v951 = vmax.f32 %v949, %v872
        %v952 = vmax.f32 %v950, %v878
        %v953 = vmax.f32 %v951, %v884
        %v954 = vmax.f32 %v952, %v953
        %v955 = vrot.slane %v954, 4
        %v956 = vmax.f32 %v954, %v955
        %v957 = vrot.slane %v956, 2
        %v958 = vmax.f32 %v956, %v957
        %v959 = vrot.slane %v958, 1
        %v960 = vmax.f32 %v958, %v959
        %v963 = vcombine.low %v923, %v960
        %v965 = vunpack.c.l.s4 1966171168
        %v966 = vunpack.c.0.s8 %v965
        %v967 = vlaneseq
        %v968 = vshrl.u32 %v967, 7
        %v969 = vsub.s32 %v966, %v968
        %v970 = vrot.slane %v963, %v969
        %v972 = vunpack.c.l.s4 1966171168
        %v973 = vunpack.c.0.s8 %v972
        %v974 = vlaneseq
        %v975 = vshrl.u32 %v974, 7
        %v976 = vsub.s32 %v973, %v975
        %v977 = vrot.slane %v970, %v976
        %v979 = vmax.f32 %v886, %v977
        %980 = vst.msk [vmem:[%s252] sm:$0x3] %vm459, %v979
      $region40: #{fdm_expand_block_new_forward.1} parent=35 // pred_fallthru
        _
      %v981 = vld [vmem:[%s252] sm:$0x3]
      %v982 = vmul.f32 %v981, 0.5
      %v983 = vadd.f32 %v982, 0.5
      %984 = vst.msk [vmem:[%s252] sm:$0x3] %vm459, %v983
      %v986 = vlaneseq
      %v987 = vshrl.u32 %v986, 7
      %v988 = vsub.s32 0, %v987
      %v989 = vrot.slane %v983, %v988
      %v990 = vlaneseq
      %v991 = vshrl.u32 %v990, 7
      %v992 = vsub.s32 1, %v991
      %v993 = vrot.slane %v983, %v992
      %v996 = vmul.f32 %v375, %v989
      %v997 = vmul.f32 %v376, %v993
      %1000 = vrot.lane.b32.xlu0 %v997, 17
      %v1001 = vpop.permute.xlu0 %1000
      %1002 = vrot.lane.b32.xlu0 %v376, 17
      %v1003 = vpop.permute.xlu0 %1002
      %1008 = vrot.lane.b32.xlu0 %v996, 17
      %v1009 = vpop.permute.xlu0 %1008
      %1010 = vrot.lane.b32.xlu0 %v375, 17
      %v1011 = vpop.permute.xlu0 %1010
      %vm1012 = vcmask 138240
      %v1013 = vsel %vm1012, %v1009, %v1001
      %v1014 = vsel %vm1012, %v1011, %v1003
      %v1019 = vsel %vm1012, %v1001, %v1009
      %v1020 = vsel %vm1012, %v1003, %v1011
      %v1021 = vmul.f32 %v1019, %v298
      %v1022 = vmul.f32 %v1013, %v299
      %v1023 = vmul.f32 %v1020, %v298
      %v1024 = vmul.f32 %v1014, %v299
      %1025 = vst [vmem:[#allocation2] sm:$0xff] %v1021
      %1026 = vst [vmem:[#allocation2 + $0x8] sm:$0xff] %v1022
      %1027 = vst [vmem:[#allocation2 + $0x10] sm:$0xff] %v1023
      %1028 = vst [vmem:[#allocation2 + $0x18] sm:$0xff] %v1024
      %1029 = vrot.lane.b32.xlu0 %v997, 16
      %v1030 = vpop.permute.xlu0 %1029
      %1031 = vrot.lane.b32.xlu0 %v376, 16
      %v1032 = vpop.permute.xlu0 %1031
      %1035 = vrot.lane.b32.xlu0 %v996, 16
      %v1036 = vpop.permute.xlu0 %1035
      %1037 = vrot.lane.b32.xlu0 %v375, 16
      %v1038 = vpop.permute.xlu0 %1037
      %vm1039 = vcmask 130048
      %v1040 = vsel %vm1039, %v1036, %v1030
      %v1041 = vsel %vm1039, %v1038, %v1032
      %v1046 = vsel %vm1039, %v1030, %v1036
      %v1047 = vsel %vm1039, %v1032, %v1038
      %v1048 = vmul.f32 %v1046, %v308
      %v1049 = vmul.f32 %v1040, %v309
      %v1050 = vmul.f32 %v1047, %v308
      %v1051 = vmul.f32 %v1041, %v309
      %1052 = vst [vmem:[#allocation2 + $0x20] sm:$0xff] %v1048
      %1053 = vst [vmem:[#allocation2 + $0x28] sm:$0xff] %v1049
      %1054 = vst [vmem:[#allocation2 + $0x30] sm:$0xff] %v1050
      %1055 = vst [vmem:[#allocation2 + $0x38] sm:$0xff] %v1051
      %1056 = vrot.lane.b32.xlu0 %v997, 15
      %v1057 = vpop.permute.xlu0 %1056
      %1058 = vrot.lane.b32.xlu0 %v376, 15
      %v1059 = vpop.permute.xlu0 %1058
      %1062 = vrot.lane.b32.xlu0 %v996, 15
      %v1063 = vpop.permute.xlu0 %1062
      %1064 = vrot.lane.b32.xlu0 %v375, 15
      %v1065 = vpop.permute.xlu0 %1064
      %vm1066 = vcmask 121856
      %v1067 = vsel %vm1066, %v1063, %v1057
      %v1068 = vsel %vm1066, %v1065, %v1059
      %v1073 = vsel %vm1066, %v1057, %v1063
      %v1074 = vsel %vm1066, %v1059, %v1065
      %v1075 = vmul.f32 %v1073, %v320
      %v1076 = vmul.f32 %v1067, %v321
      %v1077 = vmul.f32 %v1074, %v320
      %v1078 = vmul.f32 %v1068, %v321
      %1079 = vst [vmem:[#allocation2 + $0x40] sm:$0xff] %v1075
      %1080 = vst [vmem:[#allocation2 + $0x48] sm:$0xff] %v1076
      %1081 = vst [vmem:[#allocation2 + $0x50] sm:$0xff] %v1077
      %1082 = vst [vmem:[#allocation2 + $0x58] sm:$0xff] %v1078
      %1083 = vrot.lane.b32.xlu0 %v997, 1
      %v1084 = vpop.permute.xlu0 %1083
      %1085 = vrot.lane.b32.xlu0 %v376, 1
      %v1086 = vpop.permute.xlu0 %1085
      %1089 = vrot.lane.b32.xlu0 %v996, 1
      %v1090 = vpop.permute.xlu0 %1089
      %1091 = vrot.lane.b32.xlu0 %v375, 1
      %v1092 = vpop.permute.xlu0 %1091
      %vm1093 = vcmask 7168
      %v1094 = vsel %vm1093, %v1090, %v1084
      %v1095 = vsel %vm1093, %v1092, %v1086
      %v1100 = vsel %vm1093, %v1084, %v1090
      %v1101 = vsel %vm1093, %v1086, %v1092
      %v1102 = vmul.f32 %v1100, %v332
      %v1103 = vmul.f32 %v1094, %v333
      %v1104 = vmul.f32 %v1101, %v332
      %v1105 = vmul.f32 %v1095, %v333
      %1106 = vst [vmem:[#allocation2 + $0x60] sm:$0xff] %v1102
      %1107 = vst [vmem:[#allocation2 + $0x68] sm:$0xff] %v1103
      %1108 = vst [vmem:[#allocation2 + $0x70] sm:$0xff] %v1104
      %1109 = vst [vmem:[#allocation2 + $0x78] sm:$0xff] %v1105
      %v1110 = vmul.f32 %v996, %v338
      %v1111 = vmul.f32 %v997, %v339
      %v1112 = vmul.f32 %v375, %v338
      %v1113 = vmul.f32 %v376, %v339
      %1114 = vst [vmem:[#allocation2 + $0x80] sm:$0xff] %v1110
      %1115 = vst [vmem:[#allocation2 + $0x88] sm:$0xff] %v1111
      %1116 = vst [vmem:[#allocation2 + $0x90] sm:$0xff] %v1112
      %1117 = vst [vmem:[#allocation2 + $0x98] sm:$0xff] %v1113
      %1118 = vrot.lane.b32.xlu0 %v996, 127
      %v1119 = vpop.permute.xlu0 %1118
      %1120 = vrot.lane.b32.xlu0 %v997, 127
      %v1121 = vpop.permute.xlu0 %1120
      %1122 = vrot.lane.b32.xlu0 %v375, 127
      %v1123 = vpop.permute.xlu0 %1122
      %1124 = vrot.lane.b32.xlu0 %v376, 127
      %v1125 = vpop.permute.xlu0 %1124
      %vm1126 = vcmask 1039360
      %v1127 = vsel %vm1126, %v1119, %v1121
      %v1128 = vsel %vm1126, %v1123, %v1125
      %v1135 = vsel %vm1126, %v1121, %v1119
      %v1136 = vsel %vm1126, %v1125, %v1123
      %v1137 = vmul.f32 %v1127, %v344
      %v1138 = vmul.f32 %v1135, %v345
      %v1139 = vmul.f32 %v1128, %v344
      %v1140 = vmul.f32 %v1136, %v345
      %1141 = vst [vmem:[#allocation2 + $0xa0] sm:$0xff] %v1137
      %1142 = vst [vmem:[#allocation2 + $0xa8] sm:$0xff] %v1138
      %1143 = vst [vmem:[#allocation2 + $0xb0] sm:$0xff] %v1139
      %1144 = vst [vmem:[#allocation2 + $0xb8] sm:$0xff] %v1140
      %1145 = vrot.lane.b32.xlu0 %v996, 113
      %v1146 = vpop.permute.xlu0 %1145
      %1147 = vrot.lane.b32.xlu0 %v997, 113
      %v1148 = vpop.permute.xlu0 %1147
      %1149 = vrot.lane.b32.xlu0 %v375, 113
      %v1150 = vpop.permute.xlu0 %1149
      %1151 = vrot.lane.b32.xlu0 %v376, 113
      %v1152 = vpop.permute.xlu0 %1151
      %vm1153 = vcmask 924672
      %v1154 = vsel %vm1153, %v1146, %v1148
      %v1155 = vsel %vm1153, %v1150, %v1152
      %v1162 = vsel %vm1153, %v1148, %v1146
      %v1163 = vsel %vm1153, %v1152, %v1150
      %v1164 = vmul.f32 %v1154, %v358
      %v1165 = vmul.f32 %v1162, %v359
      %v1166 = vmul.f32 %v1155, %v358
      %v1167 = vmul.f32 %v1163, %v359
      %1168 = vst [vmem:[#allocation2 + $0xc0] sm:$0xff] %v1164
      %1169 = vst [vmem:[#allocation2 + $0xc8] sm:$0xff] %v1165
      %1170 = vst [vmem:[#allocation2 + $0xd0] sm:$0xff] %v1166
      %1171 = vst [vmem:[#allocation2 + $0xd8] sm:$0xff] %v1167
      %1172 = vrot.lane.b32.xlu0 %v996, 112
      %v1173 = vpop.permute.xlu0 %1172
      %1174 = vrot.lane.b32.xlu0 %v997, 112
      %v1175 = vpop.permute.xlu0 %1174
      %1176 = vrot.lane.b32.xlu0 %v375, 112
      %v1177 = vpop.permute.xlu0 %1176
      %1178 = vrot.lane.b32.xlu0 %v376, 112
      %v1179 = vpop.permute.xlu0 %1178
      %vm1180 = vcmask 916480
      %v1181 = vsel %vm1180, %v1173, %v1175
      %v1182 = vsel %vm1180, %v1177, %v1179
      %v1189 = vsel %vm1180, %v1175, %v1173
      %v1190 = vsel %vm1180, %v1179, %v1177
      %v1191 = vmul.f32 %v1181, %v364
      %v1192 = vmul.f32 %v1189, %v365
      %v1193 = vmul.f32 %v1182, %v364
      %v1194 = vmul.f32 %v1190, %v365
      %1195 = vst [vmem:[#allocation2 + $0xe0] sm:$0xff] %v1191
      %1196 = vst [vmem:[#allocation2 + $0xe8] sm:$0xff] %v1192
      %1197 = vst [vmem:[#allocation2 + $0xf0] sm:$0xff] %v1193
      %1198 = vst [vmem:[#allocation2 + $0xf8] sm:$0xff] %v1194
      %1199 = vrot.lane.b32.xlu0 %v996, 111
      %v1200 = vpop.permute.xlu0 %1199
      %1201 = vrot.lane.b32.xlu0 %v997, 111
      %v1202 = vpop.permute.xlu0 %1201
      %1203 = vrot.lane.b32.xlu0 %v375, 111
      %v1204 = vpop.permute.xlu0 %1203
      %1205 = vrot.lane.b32.xlu0 %v376, 111
      %v1206 = vpop.permute.xlu0 %1205
      %vm1207 = vcmask 908288
      %v1208 = vsel %vm1207, %v1200, %v1202
      %v1209 = vsel %vm1207, %v1204, %v1206
      %v1216 = vsel %vm1207, %v1202, %v1200
      %v1217 = vsel %vm1207, %v1206, %v1204
      %v1218 = vmul.f32 %v1208, %v370
      %v1219 = vmul.f32 %v1216, %v371
      %v1220 = vmul.f32 %v1209, %v370
      %v1221 = vmul.f32 %v1217, %v371
      %1222 = vst [vmem:[#allocation2 + $0x100] sm:$0xff] %v1218
      %1223 = vst [vmem:[#allocation2 + $0x108] sm:$0xff] %v1219
      %1224 = vst [vmem:[#allocation2 + $0x110] sm:$0xff] %v1220
      %1225 = vst [vmem:[#allocation2 + $0x118] sm:$0xff] %v1221
      %v1226 = vld [vmem:[%s2] sm:$0xff]
      %v1227 = vld [vmem:[%s2 + $0x8] sm:$0xff]
      %v1228 = vld [vmem:[#allocation2] sm:$0xff]
      %v1229 = vld [vmem:[#allocation2 + $0x8] sm:$0xff]
      %v1230 = vld [vmem:[#allocation2 + $0x10] sm:$0xff]
      %v1231 = vld [vmem:[#allocation2 + $0x18] sm:$0xff]
      %v1232 = vld [vmem:[#allocation2 + $0x20] sm:$0xff]
      %v1233 = vld [vmem:[#allocation2 + $0x28] sm:$0xff]
      %v1234 = vld [vmem:[#allocation2 + $0x30] sm:$0xff]
      %v1235 = vld [vmem:[#allocation2 + $0x38] sm:$0xff]
      %v1236 = vld [vmem:[#allocation2 + $0x40] sm:$0xff]
      %v1237 = vld [vmem:[#allocation2 + $0x48] sm:$0xff]
      %v1238 = vld [vmem:[#allocation2 + $0x50] sm:$0xff]
      %v1239 = vld [vmem:[#allocation2 + $0x58] sm:$0xff]
      %v1240 = vld [vmem:[#allocation2 + $0x60] sm:$0xff]
      %v1241 = vld [vmem:[#allocation2 + $0x68] sm:$0xff]
      %v1242 = vld [vmem:[#allocation2 + $0x70] sm:$0xff]
      %v1243 = vld [vmem:[#allocation2 + $0x78] sm:$0xff]
      %v1244 = vld [vmem:[#allocation2 + $0x80] sm:$0xff]
      %v1245 = vld [vmem:[#allocation2 + $0x88] sm:$0xff]
      %v1246 = vld [vmem:[#allocation2 + $0x90] sm:$0xff]
      %v1247 = vld [vmem:[#allocation2 + $0x98] sm:$0xff]
      %v1248 = vld [vmem:[#allocation2 + $0xa0] sm:$0xff]
      %v1249 = vld [vmem:[#allocation2 + $0xa8] sm:$0xff]
      %v1250 = vld [vmem:[#allocation2 + $0xb0] sm:$0xff]
      %v1251 = vld [vmem:[#allocation2 + $0xb8] sm:$0xff]
      %v1252 = vld [vmem:[#allocation2 + $0xc0] sm:$0xff]
      %v1253 = vld [vmem:[#allocation2 + $0xc8] sm:$0xff]
      %v1254 = vld [vmem:[#allocation2 + $0xd0] sm:$0xff]
      %v1255 = vld [vmem:[#allocation2 + $0xd8] sm:$0xff]
      %v1256 = vld [vmem:[#allocation2 + $0xe0] sm:$0xff]
      %v1257 = vld [vmem:[#allocation2 + $0xe8] sm:$0xff]
      %v1258 = vld [vmem:[#allocation2 + $0xf0] sm:$0xff]
      %v1259 = vld [vmem:[#allocation2 + $0xf8] sm:$0xff]
      %v1260 = vld [vmem:[#allocation2 + $0x100] sm:$0xff]
      %v1261 = vld [vmem:[#allocation2 + $0x108] sm:$0xff]
      %v1262 = vld [vmem:[#allocation2 + $0x110] sm:$0xff]
      %v1263 = vld [vmem:[#allocation2 + $0x118] sm:$0xff]
      %1265 = vset.pattern.permute.xlu0 0
      %1266 = vperm.xlu0 %1265, %v372
      %v1267 = vpop.permute.xlu0 %1266
      %v1270 = vsel %vm1039, %v1227, 0
      %1272 = vmatprep.subr.mxu0 %v1259
      %1273 = vmatpush1.msra.mxu0 %v1258
      %1274 = vmatprep.subr.mxu0 %v1257
      %1275 = vmatpush1.msra.mxu0 %v1256
      %1276 = vmatprep.subr.mxu0 %v1255
      %1277 = vmatpush1.msra.mxu0 %v1254
      %1278 = vmatprep.subr.mxu0 %v1253
      %1279 = vmatpush1.msra.mxu0 %v1252
      %1280 = vmatprep.subr.mxu0 %v1251
      %1281 = vmatpush1.msra.mxu0 %v1250
      %1282 = vmatprep.subr.mxu0 %v1249
      %1283 = vmatpush1.msra.mxu0 %v1248
      %1284 = vmatprep.subr.mxu0 %v1247
      %1285 = vmatpush1.msra.mxu0 %v1246
      %1286 = vmatprep.subr.mxu0 %v1245
      %1287 = vmatpush1.msra.mxu0 %v1244
      %1288 = vmatprep.subr.mxu0 %v1243
      %1289 = vmatpush1.msra.mxu0 %v1242
      %1290 = vmatprep.subr.mxu0 %v1241
      %1291 = vmatpush1.msra.mxu0 %v1240
      %1292 = vmatprep.subr.mxu0 %v1239
      %1293 = vmatpush1.msra.mxu0 %v1238
      %1294 = vmatprep.subr.mxu0 %v1237
      %1295 = vmatpush1.msra.mxu0 %v1236
      %1296 = vmatprep.subr.mxu0 %v1235
      %1297 = vmatpush1.msra.mxu0 %v1234
      %1298 = vmatprep.subr.mxu0 %v1233
      %1299 = vmatpush1.msra.mxu0 %v1232
      %1300 = vmatprep.subr.mxu0 %v1231
      %1301 = vmatpush1.msra.mxu0 %v1230
      %1302 = vmatprep.subr.mxu0 %v1229
      %1303 = vmatpush1.msra.mxu0 %v1228
      %1304 = vmatprep.subr.mxu0 0.0
      %1305 = vmatpush2.msra.mxu0 0.0
      %1306 = vmatprep.subr.mxu0 0.0
      %1307 = vmatpush2.msra.mxu0 0.0
      %1308 = vmatprep.subr.mxu0 0.0
      %1309 = vmatpush2.msra.mxu0 0.0
      %1310 = vmatprep.subr.mxu0 0.0
      %1311 = vmatpush2.msra.mxu0 0.0
      %1312 = vmatprep.subr.mxu0 0.0
      %1313 = vmatpush2.msra.mxu0 0.0
      %1314 = vmatprep.subr.mxu0 0.0
      %1315 = vmatpush2.msra.mxu0 0.0
      %1316 = vmatprep.subr.mxu0 0.0
      %1317 = vmatpush2.msra.mxu0 0.0
      %1318 = vmatprep.subr.mxu0 0.0
      %1319 = vmatpush2.msra.mxu0 0.0
      %1320 = vmatprep.subr.mxu0 0.0
      %1321 = vmatpush2.msra.mxu0 0.0
      %1322 = vmatprep.subr.mxu0 0.0
      %1323 = vmatpush2.msra.mxu0 0.0
      %1324 = vmatprep.subr.mxu0 0.0
      %1325 = vmatpush2.msra.mxu0 0.0
      %1326 = vmatprep.subr.mxu0 0.0
      %1327 = vmatpush2.msra.mxu0 0.0
      %1328 = vmatprep.subr.mxu0 0.0
      %1329 = vmatpush2.msra.mxu0 0.0
      %1330 = vmatprep.subr.mxu0 0.0
      %1331 = vmatpush2.msra.mxu0 0.0
      %1332 = vmatprep.subr.mxu0 %v1263
      %1333 = vmatpush2.msra.mxu0 %v1262
      %1334 = vmatprep.subr.mxu0 %v1261
      %1335 = vmatpush2.msra.mxu0 %v1260
      %1336 = vmatprep.mubr.f32.mxu0 %v1270
      %1337 = vmatmul.mubr.f32.gmra.mxu0 %v1226
      %v1338 = vpop.f32.mrf.mxu0
      %v1339 = vadd.f32 %v1267, %v1338
      %v1340 = vpop.f32.mrf.mxu0
      %v1341 = vadd.f32 %v1267, %v1340
      %1342 = vdwg.mxu0
      %v1343 = vadd.f32 %v1339, %v1341
      %1344 = vadd.xlane.f32.xlu0 %v1343
      %v1345 = vpop.xlane.xlu0 %1344
      %v1346 = vrot.slane %v1345, 4
      %v1347 = vadd.f32 %v1345, %v1346
      %v1348 = vrot.slane %v1347, 2
      %v1349 = vadd.f32 %v1347, %v1348
      %v1350 = vrot.slane %v1349, 1
      %v1351 = vadd.f32 %v1349, %v1350
      %s1352 = vtos %v1351
      %v1353 = vrcp.pop 2048.0
      %s1354 = vtos %v1353
      %s1355 = smul.f32 %s1352, %s1354
      %v1356 = vstv %s1355
      %v1357 = vsub.f32 %v1339, %v1356
      %v1358 = vsub.f32 %v1341, %v1356
      %v1359 = vmul.f32 %v1357, %v1357
      %v1360 = vmul.f32 %v1358, %v1358
      %v1361 = vadd.f32 %v1359, %v1360
      %1362 = vadd.xlane.f32.xlu0 %v1361
      %v1363 = vpop.xlane.xlu0 %1362
      %v1364 = vrot.slane %v1363, 4
      %v1365 = vadd.f32 %v1363, %v1364
      %v1366 = vrot.slane %v1365, 2
      %v1367 = vadd.f32 %v1365, %v1366
      %v1368 = vrot.slane %v1367, 1
      %v1369 = vadd.f32 %v1367, %v1368
      %s1370 = vtos %v1369
      %v1371 = vrcp.pop 2048.0
      %s1372 = vtos %v1371
      %s1373 = smul.f32 %s1370, %s1372
      %s1374 = sadd.f32 %s1373, 1e-05
      %v1375 = vstv %s1374
      %v1376 = vrsqrt.pop %v1375
      %s1377 = vtos %v1376
      %v1378 = vstv %s1377
      %v1379 = vmul.f32 %v1357, %v1378
      %v1380 = vmul.f32 %v1358, %v1378
      %1382 = vset.pattern.permute.xlu0 0
      %1383 = vperm.xlu0 %1382, %v373
      %v1384 = vpop.permute.xlu0 %1383
      %v1386 = vmul.f32 %v1379, %v1384
      %v1387 = vmul.f32 %v1380, %v1384
      %1389 = vset.pattern.permute.xlu0 0
      %1390 = vperm.xlu0 %1389, %v374
      %v1391 = vpop.permute.xlu0 %1390
      %v1393 = vadd.f32 %v1386, %v1391
      %v1394 = vadd.f32 %v1387, %v1391
      %v1395 = vmax.f32 %v1393, 0.0
      %v1396 = vmax.f32 %v1394, 0.0
      %1397 = vst [vmem:[%s248] sm:$0xff] %v1395
      %1398 = vst [vmem:[%s248 + $0x8] sm:$0xff] %v1396
      %p1399 = scmp.lt.s32.totalorder %s17, 1
      %s1400 = scalar_select %p1399, %s17, 1
      %s1401 = smul.addr %s1400, 2
      %s1402 = smul.addr %s1401, 8
      %s1403 = scalar_lea.vmem %s4, %s1402
      %p1404 = scmp.lt.s32.totalorder %s17, 1
      %s1405 = scalar_select %p1404, %s17, 1
      %s1406 = smul.addr %s1405, 2
      %s1407 = scalar_lea.vmem %s5, %s1406
      // Predicated region
      $region41: #{fdm_expand_block_new_forward.1} parent=35 // pred_check
        %p1408 = pneg %p129
      $region42: #{fdm_expand_block_new_forward.1} parent=35 // pred_check_branch
        %1410 = sbr.rel (%p1408) target = $region44
      $region43: #{fdm_expand_block_new_forward.1} parent=35 // pred_region
        _
      $region44: #{fdm_expand_block_new_forward.1} parent=35 // pred_fallthru
        _
      // Predicated region
      $region45: #{fdm_expand_block_new_forward.1} parent=35 // pred_check
        %p1411 = pneg %p155
      $region46: #{fdm_expand_block_new_forward.1} parent=35 // pred_check_branch
        %1413 = sbr.rel (%p1411) target = $region48
      $region47: #{fdm_expand_block_new_forward.1} parent=35 // pred_region
        _
      $region48: #{fdm_expand_block_new_forward.1} parent=35 // pred_fallthru
        _
    $region36: #{fdm_expand_block_new_forward.1} parent=5 // pred_fallthru
      _
    %p1414 = scmp.le.s32.totalorder 2, %s12
    // Predicated region
    $region49: #{fdm_expand_block_new_forward.1} parent=5 // pred_check
      %p1415 = pneg %p1414
    $region50: #{fdm_expand_block_new_forward.1} parent=5 // pred_check_branch
      %1417 = sbr.rel (%p1415) target = $region52
    $region51: #{fdm_expand_block_new_forward.1} parent=5 // pred_region
      %s1418 = ssub.s32 %s12, 2
      // Predicated region
      $region53: #{fdm_expand_block_new_forward.1} parent=51 // pred_check
        %p1419 = pneg %p135
      $region54: #{fdm_expand_block_new_forward.1} parent=51 // pred_check_branch
        %1421 = sbr.rel (%p1419) target = $region56
      $region55: #{fdm_expand_block_new_forward.1} parent=51 // pred_region
        %p1422 = scmp.lt.s32.totalorder %s18, 1
        %s1423 = scalar_select %p1422, %s18, 1
        %s1424 = smul.addr %s1423, 2
        %s1425 = smul.addr %s1424, 8
        %s1426 = scalar_lea.vmem %s4, %s1425
      $region56: #{fdm_expand_block_new_forward.1} parent=51 // pred_fallthru
        _
      // Predicated region
      $region57: #{fdm_expand_block_new_forward.1} parent=51 // pred_check
        %p1427 = pneg %p161
      $region58: #{fdm_expand_block_new_forward.1} parent=51 // pred_check_branch
        %1429 = sbr.rel (%p1427) target = $region60
      $region59: #{fdm_expand_block_new_forward.1} parent=51 // pred_region
        %p1430 = scmp.lt.s32.totalorder %s18, 1
        %s1431 = scalar_select %p1430, %s18, 1
        %s1432 = smul.addr %s1431, 2
        %s1433 = scalar_lea.vmem %s5, %s1432
      $region60: #{fdm_expand_block_new_forward.1} parent=51 // pred_fallthru
        _
    $region52: #{fdm_expand_block_new_forward.1} parent=5 // pred_fallthru
      _
  $region6: #{fdm_expand_block_new_forward.1} parent=0 // loop_footer
    %s16 = sadd.s32 1, %s12
  $region7: #{fdm_expand_block_new_forward.1} parent=0 // loop_footer_branch
    %11 = sbr.rel target = $region3
  $region8: #{fdm_expand_block_new_forward.1} parent=0 // loop_exit
    _

</llo_original>
